<compile_context>
chip_gen: v7x
topology: tpu7x:2x2x1
jax: 0.10.0
libtpu: 0.0.40
codegen_flags: <defaults>
</compile_context>

<pallas_src>
import functools

import jax
import jax.numpy as jnp
from jax.experimental import pallas as pl
from jax.experimental.pallas import tpu as pltpu


def _group_gru_kernel(x_ref, h_ref,
                      wxr_ref, wxz_ref, wxn_ref,
                      whr_ref, whz_ref, whn_ref,
                      out_ref):
    """Processes a tile of Gt GRU groups in one grid step.

    Block shapes (group-major, all in VMEM):
      x_ref   : (Gt, B, Din)
      h_ref   : (Gt, B, H)
      wx*_ref : (Gt, Din, H)   per-gate x2h weights (r, z, n)
      wh*_ref : (Gt, H,   H)   per-gate h2h weights (r, z, n)
      out_ref : (Gt, B, H)
    """
    x = x_ref[...]
    h = h_ref[...]

    def bmm(lhs, w_ref):
        # Batched-over-groups MXU matmul with f32 accumulation.
        return jnp.einsum('gbk,gko->gbo', lhs, w_ref[...],
                          preferred_element_type=jnp.float32)

    i_r = bmm(x, wxr_ref)
    i_z = bmm(x, wxz_ref)
    i_n = bmm(x, wxn_ref)
    h_r = bmm(h, whr_ref)
    h_z = bmm(h, whz_ref)
    h_n = bmm(h, whn_ref)

    # GRU elementwise math in f32 (EUP sigmoid/tanh, VPU blend).
    resetgate = jax.nn.sigmoid(i_r + h_r)
    inputgate = jax.nn.sigmoid(i_z + h_z)
    newgate = jnp.tanh(i_n + resetgate * h_n)
    hidden_f32 = h.astype(jnp.float32)
    hy = newgate + inputgate * (hidden_f32 - newgate)
    out_ref[...] = hy.astype(out_ref.dtype)


def _pick_groups_per_step(G, B, Din, H, act_bytes, w_bytes,
                          raw_block_budget_bytes=16 * 1024 * 1024):
    """Largest divisor of G whose per-step blocks fit a conservative VMEM budget.

    Budget covers one buffer set; Pallas double-buffers and gate intermediates
    get explicit headroom, so ~16 MiB raw stays comfortably under the 48 MiB
    limit we request (safe on v7x's 64 MiB physical VMEM, trivial on v5e/v6e).
    """
    per_group = ((B * Din + 2 * B * H) * act_bytes          # x, h, out blocks
                 + 3 * (Din + H) * H * w_bytes               # six weight slices
                 + 8 * B * H * 4)                            # f32 gate headroom
    gt = 1
    for cand in range(1, G + 1):
        if G % cand == 0 and cand * per_group <= raw_block_budget_bytes:
            gt = cand
    return gt


def group_gru_cell(x, hidden, w_x2h, w_h2h, *,
                   matmul_dtype=None, groups_per_step=None):
    """x: (B, G, Din), hidden: (B, G, H), w_x2h: (G, Din, 3H), w_h2h: (G, H, 3H).

    Returns hy: (B, G, H), matching PyTorch GroupGRUCell.forward.
    matmul_dtype: optional cast (e.g. jnp.bfloat16) for MXU inputs; gate math
    and accumulation stay in f32.
    """
    B, G, Din = x.shape
    H = hidden.shape[-1]
    assert w_x2h.shape == (G, Din, 3 * H)
    assert w_h2h.shape == (G, H, 3 * H)
    out_dtype = hidden.dtype

    # Group-major activations for the kernel (clean leading batched-matmul dim).
    # TODO(synk): in a persistent RNN loop, keep x/hidden group-major across
    # timesteps so these per-call transposes disappear entirely.
    x_g = jnp.transpose(x, (1, 0, 2))        # (G, B, Din)
    h_g = jnp.transpose(hidden, (1, 0, 2))   # (G, B, H)

    # Split the fused 3H gate axis into per-gate weights so the kernel never
    # slices a (., 3H) slab at non-lane-aligned offsets.
    wxr, wxz, wxn = w_x2h[:, :, :H], w_x2h[:, :, H:2 * H], w_x2h[:, :, 2 * H:]
    whr, whz, whn = w_h2h[:, :, :H], w_h2h[:, :, H:2 * H], w_h2h[:, :, 2 * H:]

    if matmul_dtype is not None:
        x_g = x_g.astype(matmul_dtype)
        h_g = h_g.astype(matmul_dtype)
        wxr, wxz, wxn = (w.astype(matmul_dtype) for w in (wxr, wxz, wxn))
        whr, whz, whn = (w.astype(matmul_dtype) for w in (whr, whz, whn))

    act_bytes = jnp.dtype(x_g.dtype).itemsize
    w_bytes = jnp.dtype(wxr.dtype).itemsize
    if groups_per_step is None:
        groups_per_step = _pick_groups_per_step(G, B, Din, H, act_bytes, w_bytes)
    Gt = groups_per_step
    assert G % Gt == 0, "groups_per_step must divide num_grus"

    def act_spec(d):
        return pl.BlockSpec((Gt, B, d), lambda g: (g, 0, 0))

    def w_spec(k):
        return pl.BlockSpec((Gt, k, H), lambda g: (g, 0, 0))

    cost = pl.CostEstimate(
        flops=2 * B * G * (Din + H) * 3 * H,
        transcendentals=3 * B * G * H,
        bytes_accessed=(3 * (Din + H) * H * G * w_bytes
                        + (B * G * Din + 2 * B * G * H) * act_bytes
                        + B * G * H * jnp.dtype(out_dtype).itemsize))

    out_g = pl.pallas_call(
        _group_gru_kernel,
        out_shape=jax.ShapeDtypeStruct((G, B, H), out_dtype),
        grid_spec=pltpu.PrefetchScalarGridSpec(
            num_scalar_prefetch=0,
            grid=(G // Gt,),
            in_specs=[act_spec(Din), act_spec(H),
                      w_spec(Din), w_spec(Din), w_spec(Din),
                      w_spec(H), w_spec(H), w_spec(H)],
            out_specs=act_spec(H),
        ),
        compiler_params=pltpu.CompilerParams(
            dimension_semantics=("parallel",),
            vmem_limit_bytes=48 * 1024 * 1024),
        cost_estimate=cost,
    )(x_g, h_g, wxr, wxz, wxn, whr, whz, whn)

    return jnp.transpose(out_g, (1, 0, 2))   # back to (B, G, H)


def group_gru_cell_ref(x, hidden, w_x2h, w_h2h):
    """Pure-JAX reference mirroring the PyTorch forward."""
    gate_x = jnp.einsum('bgi,gio->bgo', x, w_x2h)
    gate_h = jnp.einsum('bgh,gho->bgo', hidden, w_h2h)
    i_r, i_i, i_n = jnp.split(gate_x, 3, axis=2)
    h_r, h_i, h_n = jnp.split(gate_h, 3, axis=2)
    resetgate = jax.nn.sigmoid(i_r + h_r)
    inputgate = jax.nn.sigmoid(i_i + h_i)
    newgate = jnp.tanh(i_n + resetgate * h_n)
    return newgate + inputgate * (hidden - newgate)


if __name__ == "__main__":
    batch = 2
    num_grus = 4
    input_size = 16
    hidden_size = 32

    key = jax.random.PRNGKey(0)
    kx, kh, kwx, kwh = jax.random.split(key, 4)
    x = jax.random.normal(kx, (batch, num_grus, input_size), dtype=jnp.float32)
    hidden = jax.random.normal(kh, (batch, num_grus, hidden_size),
                               dtype=jnp.float32)

    # jit the wrapper so the two f32 test calls below share one compilation.
    gru = jax.jit(group_gru_cell,
                  static_argnames=("matmul_dtype", "groups_per_step"))

    # reset_parameters() in the PyTorch module overwrites every parameter with
    # ones, so the module-faithful weights are all-ones.
    w_x2h_ones = jnp.ones((num_grus, input_size, 3 * hidden_size), jnp.float32)
    w_h2h_ones = jnp.ones((num_grus, hidden_size, 3 * hidden_size), jnp.float32)

    hy = jax.block_until_ready(gru(x, hidden, w_x2h_ones, w_h2h_ones))
    hy_ref = group_gru_cell_ref(x, hidden, w_x2h_ones, w_h2h_ones)
    assert hy.shape == (batch, num_grus, hidden_size)
    assert jnp.allclose(hy, hy_ref, atol=1e-5, rtol=1e-5)

    # Stronger check with random weights (exercises the per-gate weight split).
    w_x2h = 0.01 * jax.random.normal(
        kwx, (num_grus, input_size, 3 * hidden_size), dtype=jnp.float32)
    w_h2h = 0.01 * jax.random.normal(
        kwh, (num_grus, hidden_size, 3 * hidden_size), dtype=jnp.float32)
    hy2 = jax.block_until_ready(gru(x, hidden, w_x2h, w_h2h))
    hy2_ref = group_gru_cell_ref(x, hidden, w_x2h, w_h2h)
    assert jnp.allclose(hy2, hy2_ref, atol=1e-5, rtol=1e-5)

    # Bandwidth-oriented bf16 matmul-input path (f32 accumulation + gate math).
    hy3 = jax.block_until_ready(
        gru(x, hidden, w_x2h_ones, w_h2h_ones, matmul_dtype=jnp.bfloat16))
    assert jnp.allclose(hy3, hy_ref, atol=1e-1, rtol=1e-1)

    print("KERNEL_OK")
</pallas_src>

<mosaic_0001>
module attributes {stable_mosaic.version = 11 : i64} {
  func.func @_group_gru_kernel(%arg0: i32, %arg1: memref<4x2x16xf32, #tpu.memory_space<vmem>>, %arg2: memref<4x2x32xf32, #tpu.memory_space<vmem>>, %arg3: memref<4x16x32xf32, #tpu.memory_space<vmem>>, %arg4: memref<4x16x32xf32, #tpu.memory_space<vmem>>, %arg5: memref<4x16x32xf32, #tpu.memory_space<vmem>>, %arg6: memref<4x32x32xf32, #tpu.memory_space<vmem>>, %arg7: memref<4x32x32xf32, #tpu.memory_space<vmem>>, %arg8: memref<4x32x32xf32, #tpu.memory_space<vmem>>, %arg9: memref<4x2x32xf32, #tpu.memory_space<vmem>>) attributes {dimension_semantics = [#tpu.dimension_semantics<parallel>], iteration_bounds = array<i64: 1>, scalar_prefetch = 0 : i64, scratch_operands = 0 : i64, tpu.core_type = #tpu.core_type<tc>, window_params = [{transform_indices = @transform_0, window_bounds = array<i64: 4, 2, 16>}, {transform_indices = @transform_1, window_bounds = array<i64: 4, 2, 32>}, {transform_indices = @transform_2, window_bounds = array<i64: 4, 16, 32>}, {transform_indices = @transform_3, window_bounds = array<i64: 4, 16, 32>}, {transform_indices = @transform_4, window_bounds = array<i64: 4, 16, 32>}, {transform_indices = @transform_5, window_bounds = array<i64: 4, 32, 32>}, {transform_indices = @transform_6, window_bounds = array<i64: 4, 32, 32>}, {transform_indices = @transform_7, window_bounds = array<i64: 4, 32, 32>}, {transform_indices = @transform_8, window_bounds = array<i64: 4, 2, 32>}]} {
    %c0 = arith.constant 0 : index
    %c0_0 = arith.constant 0 : index
    %c0_1 = arith.constant 0 : index
    %0 = vector.load %arg1[%c0, %c0_0, %c0_1] : memref<4x2x16xf32, #tpu.memory_space<vmem>>, vector<4x2x16xf32>
    %c0_2 = arith.constant 0 : index
    %c0_3 = arith.constant 0 : index
    %c0_4 = arith.constant 0 : index
    %1 = vector.load %arg2[%c0_2, %c0_3, %c0_4] : memref<4x2x32xf32, #tpu.memory_space<vmem>>, vector<4x2x32xf32>
    %c0_5 = arith.constant 0 : index
    %c0_6 = arith.constant 0 : index
    %c0_7 = arith.constant 0 : index
    %2 = vector.load %arg3[%c0_5, %c0_6, %c0_7] : memref<4x16x32xf32, #tpu.memory_space<vmem>>, vector<4x16x32xf32>
    "tpu.trace_start"() <{level = 10 : i32, message = "gbk,gko->gbo"}> : () -> ()
    %cst = arith.constant dense<0.000000e+00> : vector<4x2x32xf32>
    %3 = tpu.matmul %0, %2, %cst {dimension_numbers = #tpu.dot_dimension_numbers<[2], [1], [1], [2], [0, 0, 0, 1, 1, 2], [0], [0]>} : vector<4x2x16xf32>, vector<4x16x32xf32>, vector<4x2x32xf32> -> vector<4x2x32xf32>
    "tpu.trace_stop"() : () -> ()
    %c0_8 = arith.constant 0 : index
    %c0_9 = arith.constant 0 : index
    %c0_10 = arith.constant 0 : index
    %4 = vector.load %arg4[%c0_8, %c0_9, %c0_10] : memref<4x16x32xf32, #tpu.memory_space<vmem>>, vector<4x16x32xf32>
    "tpu.trace_start"() <{level = 10 : i32, message = "gbk,gko->gbo"}> : () -> ()
    %cst_11 = arith.constant dense<0.000000e+00> : vector<4x2x32xf32>
    %5 = tpu.matmul %0, %4, %cst_11 {dimension_numbers = #tpu.dot_dimension_numbers<[2], [1], [1], [2], [0, 0, 0, 1, 1, 2], [0], [0]>} : vector<4x2x16xf32>, vector<4x16x32xf32>, vector<4x2x32xf32> -> vector<4x2x32xf32>
    "tpu.trace_stop"() : () -> ()
    %c0_12 = arith.constant 0 : index
    %c0_13 = arith.constant 0 : index
    %c0_14 = arith.constant 0 : index
    %6 = vector.load %arg5[%c0_12, %c0_13, %c0_14] : memref<4x16x32xf32, #tpu.memory_space<vmem>>, vector<4x16x32xf32>
    "tpu.trace_start"() <{level = 10 : i32, message = "gbk,gko->gbo"}> : () -> ()
    %cst_15 = arith.constant dense<0.000000e+00> : vector<4x2x32xf32>
    %7 = tpu.matmul %0, %6, %cst_15 {dimension_numbers = #tpu.dot_dimension_numbers<[2], [1], [1], [2], [0, 0, 0, 1, 1, 2], [0], [0]>} : vector<4x2x16xf32>, vector<4x16x32xf32>, vector<4x2x32xf32> -> vector<4x2x32xf32>
    "tpu.trace_stop"() : () -> ()
    %c0_16 = arith.constant 0 : index
    %c0_17 = arith.constant 0 : index
    %c0_18 = arith.constant 0 : index
    %8 = vector.load %arg6[%c0_16, %c0_17, %c0_18] : memref<4x32x32xf32, #tpu.memory_space<vmem>>, vector<4x32x32xf32>
    "tpu.trace_start"() <{level = 10 : i32, message = "gbk,gko->gbo"}> : () -> ()
    %cst_19 = arith.constant dense<0.000000e+00> : vector<4x2x32xf32>
    %9 = tpu.matmul %1, %8, %cst_19 {dimension_numbers = #tpu.dot_dimension_numbers<[2], [1], [1], [2], [0, 0, 0, 1, 1, 2], [0], [0]>} : vector<4x2x32xf32>, vector<4x32x32xf32>, vector<4x2x32xf32> -> vector<4x2x32xf32>
    "tpu.trace_stop"() : () -> ()
    %c0_20 = arith.constant 0 : index
    %c0_21 = arith.constant 0 : index
    %c0_22 = arith.constant 0 : index
    %10 = vector.load %arg7[%c0_20, %c0_21, %c0_22] : memref<4x32x32xf32, #tpu.memory_space<vmem>>, vector<4x32x32xf32>
    "tpu.trace_start"() <{level = 10 : i32, message = "gbk,gko->gbo"}> : () -> ()
    %cst_23 = arith.constant dense<0.000000e+00> : vector<4x2x32xf32>
    %11 = tpu.matmul %1, %10, %cst_23 {dimension_numbers = #tpu.dot_dimension_numbers<[2], [1], [1], [2], [0, 0, 0, 1, 1, 2], [0], [0]>} : vector<4x2x32xf32>, vector<4x32x32xf32>, vector<4x2x32xf32> -> vector<4x2x32xf32>
    "tpu.trace_stop"() : () -> ()
    %c0_24 = arith.constant 0 : index
    %c0_25 = arith.constant 0 : index
    %c0_26 = arith.constant 0 : index
    %12 = vector.load %arg8[%c0_24, %c0_25, %c0_26] : memref<4x32x32xf32, #tpu.memory_space<vmem>>, vector<4x32x32xf32>
    "tpu.trace_start"() <{level = 10 : i32, message = "gbk,gko->gbo"}> : () -> ()
    %cst_27 = arith.constant dense<0.000000e+00> : vector<4x2x32xf32>
    %13 = tpu.matmul %1, %12, %cst_27 {dimension_numbers = #tpu.dot_dimension_numbers<[2], [1], [1], [2], [0, 0, 0, 1, 1, 2], [0], [0]>} : vector<4x2x32xf32>, vector<4x32x32xf32>, vector<4x2x32xf32> -> vector<4x2x32xf32>
    "tpu.trace_stop"() : () -> ()
    %14 = arith.addf %3, %9 : vector<4x2x32xf32>
    %15 = arith.negf %14 : vector<4x2x32xf32>
    %16 = math.exp %15 : vector<4x2x32xf32>
    %cst_28 = arith.constant 1.000000e+00 : f32
    %17 = vector.broadcast %cst_28 : f32 to vector<4x2x32xf32>
    %18 = arith.addf %17, %16 : vector<4x2x32xf32>
    %19 = arith.divf %17, %18 : vector<4x2x32xf32>
    %20 = arith.addf %5, %11 : vector<4x2x32xf32>
    %21 = arith.negf %20 : vector<4x2x32xf32>
    %22 = math.exp %21 : vector<4x2x32xf32>
    %cst_29 = arith.constant 1.000000e+00 : f32
    %23 = vector.broadcast %cst_29 : f32 to vector<4x2x32xf32>
    %24 = arith.addf %23, %22 : vector<4x2x32xf32>
    %25 = arith.divf %23, %24 : vector<4x2x32xf32>
    %26 = arith.mulf %19, %13 : vector<4x2x32xf32>
    %27 = arith.addf %7, %26 : vector<4x2x32xf32>
    %28 = math.tanh %27 : vector<4x2x32xf32>
    %29 = arith.subf %1, %28 : vector<4x2x32xf32>
    %30 = arith.mulf %25, %29 : vector<4x2x32xf32>
    %31 = arith.addf %28, %30 : vector<4x2x32xf32>
    %c0_30 = arith.constant 0 : index
    %c0_31 = arith.constant 0 : index
    %c0_32 = arith.constant 0 : index
    %32 = vector.load %arg9[%c0_30, %c0_31, %c0_32] : memref<4x2x32xf32, #tpu.memory_space<vmem>>, vector<4x2x32xf32>
    tpu.vector_store %arg9[%c0_30, %c0_31, %c0_32], %31 {strides = array<i32>} : memref<4x2x32xf32, #tpu.memory_space<vmem>>, vector<4x2x32xf32>,
    return
  }
  func.func @transform_0(%arg0: i32) -> (i32, i32, i32) {
    %c0_i32 = arith.constant 0 : i32
    %c0_i32_0 = arith.constant 0 : i32
    %c0_i32_1 = arith.constant 0 : i32
    return %arg0, %c0_i32, %c0_i32_0 : i32, i32, i32
  }
  func.func @transform_1(%arg0: i32) -> (i32, i32, i32) {
    %c0_i32 = arith.constant 0 : i32
    %c0_i32_0 = arith.constant 0 : i32
    %c0_i32_1 = arith.constant 0 : i32
    return %arg0, %c0_i32, %c0_i32_0 : i32, i32, i32
  }
  func.func @transform_2(%arg0: i32) -> (i32, i32, i32) {
    %c0_i32 = arith.constant 0 : i32
    %c0_i32_0 = arith.constant 0 : i32
    %c0_i32_1 = arith.constant 0 : i32
    return %arg0, %c0_i32, %c0_i32_0 : i32, i32, i32
  }
  func.func @transform_3(%arg0: i32) -> (i32, i32, i32) {
    %c0_i32 = arith.constant 0 : i32
    %c0_i32_0 = arith.constant 0 : i32
    %c0_i32_1 = arith.constant 0 : i32
    return %arg0, %c0_i32, %c0_i32_0 : i32, i32, i32
  }
  func.func @transform_4(%arg0: i32) -> (i32, i32, i32) {
    %c0_i32 = arith.constant 0 : i32
    %c0_i32_0 = arith.constant 0 : i32
    %c0_i32_1 = arith.constant 0 : i32
    return %arg0, %c0_i32, %c0_i32_0 : i32, i32, i32
  }
  func.func @transform_5(%arg0: i32) -> (i32, i32, i32) {
    %c0_i32 = arith.constant 0 : i32
    %c0_i32_0 = arith.constant 0 : i32
    %c0_i32_1 = arith.constant 0 : i32
    return %arg0, %c0_i32, %c0_i32_0 : i32, i32, i32
  }
  func.func @transform_6(%arg0: i32) -> (i32, i32, i32) {
    %c0_i32 = arith.constant 0 : i32
    %c0_i32_0 = arith.constant 0 : i32
    %c0_i32_1 = arith.constant 0 : i32
    return %arg0, %c0_i32, %c0_i32_0 : i32, i32, i32
  }
  func.func @transform_7(%arg0: i32) -> (i32, i32, i32) {
    %c0_i32 = arith.constant 0 : i32
    %c0_i32_0 = arith.constant 0 : i32
    %c0_i32_1 = arith.constant 0 : i32
    return %arg0, %c0_i32, %c0_i32_0 : i32, i32, i32
  }
  func.func @transform_8(%arg0: i32) -> (i32, i32, i32) {
    %c0_i32 = arith.constant 0 : i32
    %c0_i32_0 = arith.constant 0 : i32
    %c0_i32_1 = arith.constant 0 : i32
    return %arg0, %c0_i32, %c0_i32_0 : i32, i32, i32
  }
}

</mosaic_0001>

<llo_original>
// kernel: group_gru_cell.1
$region0: #{group_gru_cell.1}
  #allocation0 [shape = 'u32[]', space=smem, size = 0x4, offset = 0x4, fixed_abs, tag = 'smem constant byte address 0x4 - core index']
  #allocation1 [shape = 'u32[144,128]{1,0:T(1,128)}', space=vmem, size = 0x12000, scoped, tag = 'internal scratch']
  %s0 = inlined_call_operand.vmem [shape: f32[4,2,16], index: 0, kind: input, shape index: {}]
  %s1 = inlined_call_operand.vmem [shape: f32[4,2,32], index: 1, kind: input, shape index: {}]
  %s2 = inlined_call_operand.vmem [shape: f32[4,16,32], index: 2, kind: input, shape index: {}]
  %s3 = inlined_call_operand.vmem [shape: f32[4,16,32], index: 3, kind: input, shape index: {}]
  %s4 = inlined_call_operand.vmem [shape: f32[4,16,32], index: 4, kind: input, shape index: {}]
  %s5 = inlined_call_operand.vmem [shape: f32[4,32,32], index: 5, kind: input, shape index: {}]
  %s6 = inlined_call_operand.vmem [shape: f32[4,32,32], index: 6, kind: input, shape index: {}]
  %s7 = inlined_call_operand.vmem [shape: f32[4,32,32], index: 7, kind: input, shape index: {}]
  %s8 = inlined_call_operand.vmem [shape: f32[4,2,32], index: 8, kind: output, shape index: {}]
  %s9 = sld [smem:[#allocation0]]
  $region42: #{group_gru_cell.1} parent=0
    _
  %s11 = ssub.s32 1, %s9
  %s12 = scalar_select 0, %s11, %s9
  // Predicated region
  $region2: #{group_gru_cell.1} parent=0 // pred_check
    _
  $region3: #{group_gru_cell.1} parent=0 // pred_check_branch
    %14 = sbr.rel (0) target = $region5
  $region4: #{group_gru_cell.1} parent=0 // pred_region
    _
  $region5: #{group_gru_cell.1} parent=0 // pred_fallthru
    _
  // Predicated region
  $region6: #{group_gru_cell.1} parent=0 // pred_check
    _
  $region7: #{group_gru_cell.1} parent=0 // pred_check_branch
    %16 = sbr.rel (0) target = $region9
  $region8: #{group_gru_cell.1} parent=0 // pred_region
    _
  $region9: #{group_gru_cell.1} parent=0 // pred_fallthru
    _
  // Predicated region
  $region10: #{group_gru_cell.1} parent=0 // pred_check
    _
  $region11: #{group_gru_cell.1} parent=0 // pred_check_branch
    %18 = sbr.rel (0) target = $region13
  $region12: #{group_gru_cell.1} parent=0 // pred_region
    _
  $region13: #{group_gru_cell.1} parent=0 // pred_fallthru
    _
  // Predicated region
  $region14: #{group_gru_cell.1} parent=0 // pred_check
    _
  $region15: #{group_gru_cell.1} parent=0 // pred_check_branch
    %20 = sbr.rel (0) target = $region17
  $region16: #{group_gru_cell.1} parent=0 // pred_region
    _
  $region17: #{group_gru_cell.1} parent=0 // pred_fallthru
    _
  // Predicated region
  $region18: #{group_gru_cell.1} parent=0 // pred_check
    _
  $region19: #{group_gru_cell.1} parent=0 // pred_check_branch
    %22 = sbr.rel (0) target = $region21
  $region20: #{group_gru_cell.1} parent=0 // pred_region
    _
  $region21: #{group_gru_cell.1} parent=0 // pred_fallthru
    _
  // Predicated region
  $region22: #{group_gru_cell.1} parent=0 // pred_check
    _
  $region23: #{group_gru_cell.1} parent=0 // pred_check_branch
    %24 = sbr.rel (0) target = $region25
  $region24: #{group_gru_cell.1} parent=0 // pred_region
    _
  $region25: #{group_gru_cell.1} parent=0 // pred_fallthru
    _
  // Predicated region
  $region26: #{group_gru_cell.1} parent=0 // pred_check
    _
  $region27: #{group_gru_cell.1} parent=0 // pred_check_branch
    %26 = sbr.rel (0) target = $region29
  $region28: #{group_gru_cell.1} parent=0 // pred_region
    _
  $region29: #{group_gru_cell.1} parent=0 // pred_fallthru
    _
  // Predicated region
  $region30: #{group_gru_cell.1} parent=0 // pred_check
    _
  $region31: #{group_gru_cell.1} parent=0 // pred_check_branch
    %28 = sbr.rel (0) target = $region33
  $region32: #{group_gru_cell.1} parent=0 // pred_region
    _
  $region33: #{group_gru_cell.1} parent=0 // pred_fallthru
    _
  %v29 = vld [vmem:[%s0] sm:$0x3]
  %v30 = vld [vmem:[%s0 + $0x2] sm:$0x3]
  %v31 = vld [vmem:[%s0 + $0x4] sm:$0x3]
  %v32 = vld [vmem:[%s0 + $0x6] sm:$0x3]
  %v33 = vld [vmem:[%s1] sm:$0x3]
  %v34 = vld [vmem:[%s1 + $0x2] sm:$0x3]
  %v35 = vld [vmem:[%s1 + $0x4] sm:$0x3]
  %v36 = vld [vmem:[%s1 + $0x6] sm:$0x3]
  %v37 = vld [vmem:[%s2] sm:$0xff]
  %v38 = vld [vmem:[%s2 + $0x8] sm:$0xff]
  %v39 = vld [vmem:[%s2 + $0x10] sm:$0xff]
  %v40 = vld [vmem:[%s2 + $0x18] sm:$0xff]
  %v41 = vld [vmem:[%s2 + $0x20] sm:$0xff]
  %v42 = vld [vmem:[%s2 + $0x28] sm:$0xff]
  %v43 = vld [vmem:[%s2 + $0x30] sm:$0xff]
  %v44 = vld [vmem:[%s2 + $0x38] sm:$0xff]
  %v45 = vld [vmem:[%s3] sm:$0xff]
  %v46 = vld [vmem:[%s3 + $0x8] sm:$0xff]
  %v47 = vld [vmem:[%s3 + $0x10] sm:$0xff]
  %v48 = vld [vmem:[%s3 + $0x18] sm:$0xff]
  %v49 = vld [vmem:[%s3 + $0x20] sm:$0xff]
  %v50 = vld [vmem:[%s3 + $0x28] sm:$0xff]
  %v51 = vld [vmem:[%s3 + $0x30] sm:$0xff]
  %v52 = vld [vmem:[%s3 + $0x38] sm:$0xff]
  %v53 = vld [vmem:[%s4] sm:$0xff]
  %v54 = vld [vmem:[%s4 + $0x8] sm:$0xff]
  %v55 = vld [vmem:[%s4 + $0x10] sm:$0xff]
  %v56 = vld [vmem:[%s4 + $0x18] sm:$0xff]
  %v57 = vld [vmem:[%s4 + $0x20] sm:$0xff]
  %v58 = vld [vmem:[%s4 + $0x28] sm:$0xff]
  %v59 = vld [vmem:[%s4 + $0x30] sm:$0xff]
  %v60 = vld [vmem:[%s4 + $0x38] sm:$0xff]
  %v61 = vld [vmem:[%s5] sm:$0xff]
  %v62 = vld [vmem:[%s5 + $0x8] sm:$0xff]
  %v63 = vld [vmem:[%s5 + $0x10] sm:$0xff]
  %v64 = vld [vmem:[%s5 + $0x18] sm:$0xff]
  %v65 = vld [vmem:[%s5 + $0x20] sm:$0xff]
  %v66 = vld [vmem:[%s5 + $0x28] sm:$0xff]
  %v67 = vld [vmem:[%s5 + $0x30] sm:$0xff]
  %v68 = vld [vmem:[%s5 + $0x38] sm:$0xff]
  %v69 = vld [vmem:[%s5 + $0x40] sm:$0xff]
  %v70 = vld [vmem:[%s5 + $0x48] sm:$0xff]
  %v71 = vld [vmem:[%s5 + $0x50] sm:$0xff]
  %v72 = vld [vmem:[%s5 + $0x58] sm:$0xff]
  %v73 = vld [vmem:[%s5 + $0x60] sm:$0xff]
  %v74 = vld [vmem:[%s5 + $0x68] sm:$0xff]
  %v75 = vld [vmem:[%s5 + $0x70] sm:$0xff]
  %v76 = vld [vmem:[%s5 + $0x78] sm:$0xff]
  %vm77 = vcmask 261120
  %v79 = vsel %vm77, %v33, 0
  %81 = vmatprep.subr.mxu0 0.0
  %82 = vmatpush1.msra.mxu0 %v61
  %83 = vmatprep.subr.mxu0 0.0
  %84 = vmatpush1.msra.mxu0 %v62
  %85 = vmatprep.subr.mxu0 0.0
  %86 = vmatpush1.msra.mxu0 %v63
  %87 = vmatprep.subr.mxu0 0.0
  %88 = vmatpush1.msra.mxu0 %v64
  %89 = vmatprep.subr.mxu0 0.0
  %90 = vmatpush1.msra.mxu0 0.0
  %91 = vmatprep.subr.mxu0 0.0
  %92 = vmatpush1.msra.mxu0 0.0
  %93 = vmatprep.subr.mxu0 0.0
  %94 = vmatpush1.msra.mxu0 0.0
  %95 = vmatprep.subr.mxu0 0.0
  %96 = vmatpush1.msra.mxu0 0.0
  %97 = vmatprep.subr.mxu0 0.0
  %98 = vmatpush1.msra.mxu0 0.0
  %99 = vmatprep.subr.mxu0 0.0
  %100 = vmatpush1.msra.mxu0 0.0
  %101 = vmatprep.subr.mxu0 0.0
  %102 = vmatpush1.msra.mxu0 0.0
  %103 = vmatprep.subr.mxu0 0.0
  %104 = vmatpush1.msra.mxu0 0.0
  %105 = vmatprep.subr.mxu0 0.0
  %106 = vmatpush1.msra.mxu0 0.0
  %107 = vmatprep.subr.mxu0 0.0
  %108 = vmatpush1.msra.mxu0 0.0
  %109 = vmatprep.subr.mxu0 0.0
  %110 = vmatpush1.msra.mxu0 0.0
  %111 = vmatprep.subr.mxu0 0.0
  %112 = vmatpush1.msra.mxu0 0.0
  %113 = vmatprep.subr.mxu0 0.0
  %114 = vmatpush1.msra.mxu0 0.0
  %115 = vmatprep.subr.mxu0 0.0
  %116 = vmatpush1.msra.mxu0 0.0
  %117 = vmatprep.subr.mxu0 0.0
  %118 = vmatpush1.msra.mxu0 0.0
  %119 = vmatprep.subr.mxu0 0.0
  %120 = vmatpush1.msra.mxu0 0.0
  %121 = vmatprep.subr.mxu0 0.0
  %122 = vmatpush1.msra.mxu0 0.0
  %123 = vmatprep.subr.mxu0 0.0
  %124 = vmatpush1.msra.mxu0 0.0
  %125 = vmatprep.subr.mxu0 0.0
  %126 = vmatpush1.msra.mxu0 0.0
  %127 = vmatprep.subr.mxu0 0.0
  %128 = vmatpush1.msra.mxu0 0.0
  %129 = vmatprep.subr.mxu0 0.0
  %130 = vmatpush1.msra.mxu0 0.0
  %131 = vmatprep.subr.mxu0 0.0
  %132 = vmatpush1.msra.mxu0 0.0
  %133 = vmatprep.subr.mxu0 0.0
  %134 = vmatpush1.msra.mxu0 0.0
  %135 = vmatprep.subr.mxu0 0.0
  %136 = vmatpush1.msra.mxu0 0.0
  %137 = vmatprep.subr.mxu0 0.0
  %138 = vmatpush1.msra.mxu0 0.0
  %139 = vmatprep.subr.mxu0 0.0
  %140 = vmatpush1.msra.mxu0 0.0
  %141 = vmatprep.subr.mxu0 0.0
  %142 = vmatpush1.msra.mxu0 0.0
  %143 = vmatprep.subr.mxu0 0.0
  %144 = vmatpush1.msra.mxu0 0.0
  %145 = vmatprep.mubr.f32.mxu0 0.0
  %146 = vmatmul.mubr.f32.gmra.mrb[0].mxu0 %v79
  %v147 = vpop.f32.mrb[0].mxu0
  %v148 = vadd.f32 0.0, %v147
  %v149 = vpop.f32.mrb[0].mxu0
  %150 = vdwg.mxu0
  %v152 = vsel %vm77, %v34, 0
  %154 = vmatprep.subr.mxu0 0.0
  %155 = vmatpush1.msra.mxu0 %v65
  %156 = vmatprep.subr.mxu0 0.0
  %157 = vmatpush1.msra.mxu0 %v66
  %158 = vmatprep.subr.mxu0 0.0
  %159 = vmatpush1.msra.mxu0 %v67
  %160 = vmatprep.subr.mxu0 0.0
  %161 = vmatpush1.msra.mxu0 %v68
  %162 = vmatprep.subr.mxu0 0.0
  %163 = vmatpush1.msra.mxu0 0.0
  %164 = vmatprep.subr.mxu0 0.0
  %165 = vmatpush1.msra.mxu0 0.0
  %166 = vmatprep.subr.mxu0 0.0
  %167 = vmatpush1.msra.mxu0 0.0
  %168 = vmatprep.subr.mxu0 0.0
  %169 = vmatpush1.msra.mxu0 0.0
  %170 = vmatprep.subr.mxu0 0.0
  %171 = vmatpush1.msra.mxu0 0.0
  %172 = vmatprep.subr.mxu0 0.0
  %173 = vmatpush1.msra.mxu0 0.0
  %174 = vmatprep.subr.mxu0 0.0
  %175 = vmatpush1.msra.mxu0 0.0
  %176 = vmatprep.subr.mxu0 0.0
  %177 = vmatpush1.msra.mxu0 0.0
  %178 = vmatprep.subr.mxu0 0.0
  %179 = vmatpush1.msra.mxu0 0.0
  %180 = vmatprep.subr.mxu0 0.0
  %181 = vmatpush1.msra.mxu0 0.0
  %182 = vmatprep.subr.mxu0 0.0
  %183 = vmatpush1.msra.mxu0 0.0
  %184 = vmatprep.subr.mxu0 0.0
  %185 = vmatpush1.msra.mxu0 0.0
  %186 = vmatprep.subr.mxu0 0.0
  %187 = vmatpush1.msra.mxu0 0.0
  %188 = vmatprep.subr.mxu0 0.0
  %189 = vmatpush1.msra.mxu0 0.0
  %190 = vmatprep.subr.mxu0 0.0
  %191 = vmatpush1.msra.mxu0 0.0
  %192 = vmatprep.subr.mxu0 0.0
  %193 = vmatpush1.msra.mxu0 0.0
  %194 = vmatprep.subr.mxu0 0.0
  %195 = vmatpush1.msra.mxu0 0.0
  %196 = vmatprep.subr.mxu0 0.0
  %197 = vmatpush1.msra.mxu0 0.0
  %198 = vmatprep.subr.mxu0 0.0
  %199 = vmatpush1.msra.mxu0 0.0
  %200 = vmatprep.subr.mxu0 0.0
  %201 = vmatpush1.msra.mxu0 0.0
  %202 = vmatprep.subr.mxu0 0.0
  %203 = vmatpush1.msra.mxu0 0.0
  %204 = vmatprep.subr.mxu0 0.0
  %205 = vmatpush1.msra.mxu0 0.0
  %206 = vmatprep.subr.mxu0 0.0
  %207 = vmatpush1.msra.mxu0 0.0
  %208 = vmatprep.subr.mxu0 0.0
  %209 = vmatpush1.msra.mxu0 0.0
  %210 = vmatprep.subr.mxu0 0.0
  %211 = vmatpush1.msra.mxu0 0.0
  %212 = vmatprep.subr.mxu0 0.0
  %213 = vmatpush1.msra.mxu0 0.0
  %214 = vmatprep.subr.mxu0 0.0
  %215 = vmatpush1.msra.mxu0 0.0
  %216 = vmatprep.subr.mxu0 0.0
  %217 = vmatpush1.msra.mxu0 0.0
  %218 = vmatprep.mubr.f32.mxu0 0.0
  %219 = vmatmul.mubr.f32.gmra.mrb[0].mxu0 %v152
  %v220 = vpop.f32.mrb[0].mxu0
  %v221 = vadd.f32 0.0, %v220
  %v222 = vpop.f32.mrb[0].mxu0
  %223 = vdwg.mxu0
  %v225 = vsel %vm77, %v35, 0
  %227 = vmatprep.subr.mxu0 0.0
  %228 = vmatpush1.msra.mxu0 %v69
  %229 = vmatprep.subr.mxu0 0.0
  %230 = vmatpush1.msra.mxu0 %v70
  %231 = vmatprep.subr.mxu0 0.0
  %232 = vmatpush1.msra.mxu0 %v71
  %233 = vmatprep.subr.mxu0 0.0
  %234 = vmatpush1.msra.mxu0 %v72
  %235 = vmatprep.subr.mxu0 0.0
  %236 = vmatpush1.msra.mxu0 0.0
  %237 = vmatprep.subr.mxu0 0.0
  %238 = vmatpush1.msra.mxu0 0.0
  %239 = vmatprep.subr.mxu0 0.0
  %240 = vmatpush1.msra.mxu0 0.0
  %241 = vmatprep.subr.mxu0 0.0
  %242 = vmatpush1.msra.mxu0 0.0
  %243 = vmatprep.subr.mxu0 0.0
  %244 = vmatpush1.msra.mxu0 0.0
  %245 = vmatprep.subr.mxu0 0.0
  %246 = vmatpush1.msra.mxu0 0.0
  %247 = vmatprep.subr.mxu0 0.0
  %248 = vmatpush1.msra.mxu0 0.0
  %249 = vmatprep.subr.mxu0 0.0
  %250 = vmatpush1.msra.mxu0 0.0
  %251 = vmatprep.subr.mxu0 0.0
  %252 = vmatpush1.msra.mxu0 0.0
  %253 = vmatprep.subr.mxu0 0.0
  %254 = vmatpush1.msra.mxu0 0.0
  %255 = vmatprep.subr.mxu0 0.0
  %256 = vmatpush1.msra.mxu0 0.0
  %257 = vmatprep.subr.mxu0 0.0
  %258 = vmatpush1.msra.mxu0 0.0
  %259 = vmatprep.subr.mxu0 0.0
  %260 = vmatpush1.msra.mxu0 0.0
  %261 = vmatprep.subr.mxu0 0.0
  %262 = vmatpush1.msra.mxu0 0.0
  %263 = vmatprep.subr.mxu0 0.0
  %264 = vmatpush1.msra.mxu0 0.0
  %265 = vmatprep.subr.mxu0 0.0
  %266 = vmatpush1.msra.mxu0 0.0
  %267 = vmatprep.subr.mxu0 0.0
  %268 = vmatpush1.msra.mxu0 0.0
  %269 = vmatprep.subr.mxu0 0.0
  %270 = vmatpush1.msra.mxu0 0.0
  %271 = vmatprep.subr.mxu0 0.0
  %272 = vmatpush1.msra.mxu0 0.0
  %273 = vmatprep.subr.mxu0 0.0
  %274 = vmatpush1.msra.mxu0 0.0
  %275 = vmatprep.subr.mxu0 0.0
  %276 = vmatpush1.msra.mxu0 0.0
  %277 = vmatprep.subr.mxu0 0.0
  %278 = vmatpush1.msra.mxu0 0.0
  %279 = vmatprep.subr.mxu0 0.0
  %280 = vmatpush1.msra.mxu0 0.0
  %281 = vmatprep.subr.mxu0 0.0
  %282 = vmatpush1.msra.mxu0 0.0
  %283 = vmatprep.subr.mxu0 0.0
  %284 = vmatpush1.msra.mxu0 0.0
  %285 = vmatprep.subr.mxu0 0.0
  %286 = vmatpush1.msra.mxu0 0.0
  %287 = vmatprep.subr.mxu0 0.0
  %288 = vmatpush1.msra.mxu0 0.0
  %289 = vmatprep.subr.mxu0 0.0
  %290 = vmatpush1.msra.mxu0 0.0
  %291 = vmatprep.mubr.f32.mxu0 0.0
  %292 = vmatmul.mubr.f32.gmra.mrb[0].mxu0 %v225
  %v293 = vpop.f32.mrb[0].mxu0
  %v294 = vadd.f32 0.0, %v293
  %v295 = vpop.f32.mrb[0].mxu0
  %296 = vdwg.mxu0
  %v298 = vsel %vm77, %v36, 0
  %300 = vmatprep.subr.mxu0 0.0
  %301 = vmatpush1.msra.mxu0 %v73
  %302 = vmatprep.subr.mxu0 0.0
  %303 = vmatpush1.msra.mxu0 %v74
  %304 = vmatprep.subr.mxu0 0.0
  %305 = vmatpush1.msra.mxu0 %v75
  %306 = vmatprep.subr.mxu0 0.0
  %307 = vmatpush1.msra.mxu0 %v76
  %308 = vmatprep.subr.mxu0 0.0
  %309 = vmatpush1.msra.mxu0 0.0
  %310 = vmatprep.subr.mxu0 0.0
  %311 = vmatpush1.msra.mxu0 0.0
  %312 = vmatprep.subr.mxu0 0.0
  %313 = vmatpush1.msra.mxu0 0.0
  %314 = vmatprep.subr.mxu0 0.0
  %315 = vmatpush1.msra.mxu0 0.0
  %316 = vmatprep.subr.mxu0 0.0
  %317 = vmatpush1.msra.mxu0 0.0
  %318 = vmatprep.subr.mxu0 0.0
  %319 = vmatpush1.msra.mxu0 0.0
  %320 = vmatprep.subr.mxu0 0.0
  %321 = vmatpush1.msra.mxu0 0.0
  %322 = vmatprep.subr.mxu0 0.0
  %323 = vmatpush1.msra.mxu0 0.0
  %324 = vmatprep.subr.mxu0 0.0
  %325 = vmatpush1.msra.mxu0 0.0
  %326 = vmatprep.subr.mxu0 0.0
  %327 = vmatpush1.msra.mxu0 0.0
  %328 = vmatprep.subr.mxu0 0.0
  %329 = vmatpush1.msra.mxu0 0.0
  %330 = vmatprep.subr.mxu0 0.0
  %331 = vmatpush1.msra.mxu0 0.0
  %332 = vmatprep.subr.mxu0 0.0
  %333 = vmatpush1.msra.mxu0 0.0
  %334 = vmatprep.subr.mxu0 0.0
  %335 = vmatpush1.msra.mxu0 0.0
  %336 = vmatprep.subr.mxu0 0.0
  %337 = vmatpush1.msra.mxu0 0.0
  %338 = vmatprep.subr.mxu0 0.0
  %339 = vmatpush1.msra.mxu0 0.0
  %340 = vmatprep.subr.mxu0 0.0
  %341 = vmatpush1.msra.mxu0 0.0
  %342 = vmatprep.subr.mxu0 0.0
  %343 = vmatpush1.msra.mxu0 0.0
  %344 = vmatprep.subr.mxu0 0.0
  %345 = vmatpush1.msra.mxu0 0.0
  %346 = vmatprep.subr.mxu0 0.0
  %347 = vmatpush1.msra.mxu0 0.0
  %348 = vmatprep.subr.mxu0 0.0
  %349 = vmatpush1.msra.mxu0 0.0
  %350 = vmatprep.subr.mxu0 0.0
  %351 = vmatpush1.msra.mxu0 0.0
  %352 = vmatprep.subr.mxu0 0.0
  %353 = vmatpush1.msra.mxu0 0.0
  %354 = vmatprep.subr.mxu0 0.0
  %355 = vmatpush1.msra.mxu0 0.0
  %356 = vmatprep.subr.mxu0 0.0
  %357 = vmatpush1.msra.mxu0 0.0
  %358 = vmatprep.subr.mxu0 0.0
  %359 = vmatpush1.msra.mxu0 0.0
  %360 = vmatprep.subr.mxu0 0.0
  %361 = vmatpush1.msra.mxu0 0.0
  %362 = vmatprep.subr.mxu0 0.0
  %363 = vmatpush1.msra.mxu0 0.0
  %364 = vmatprep.mubr.f32.mxu0 0.0
  %365 = vmatmul.mubr.f32.gmra.mrb[0].mxu0 %v298
  %v366 = vpop.f32.mrb[0].mxu0
  %v367 = vadd.f32 0.0, %v366
  %v368 = vpop.f32.mrb[0].mxu0
  %369 = vdwg.mxu0
  %v370 = vld [vmem:[%s6] sm:$0xff]
  %v371 = vld [vmem:[%s6 + $0x8] sm:$0xff]
  %v372 = vld [vmem:[%s6 + $0x10] sm:$0xff]
  %v373 = vld [vmem:[%s6 + $0x18] sm:$0xff]
  %v374 = vld [vmem:[%s6 + $0x20] sm:$0xff]
  %v375 = vld [vmem:[%s6 + $0x28] sm:$0xff]
  %v376 = vld [vmem:[%s6 + $0x30] sm:$0xff]
  %v377 = vld [vmem:[%s6 + $0x38] sm:$0xff]
  %v378 = vld [vmem:[%s6 + $0x40] sm:$0xff]
  %v379 = vld [vmem:[%s6 + $0x48] sm:$0xff]
  %v380 = vld [vmem:[%s6 + $0x50] sm:$0xff]
  %v381 = vld [vmem:[%s6 + $0x58] sm:$0xff]
  %v382 = vld [vmem:[%s6 + $0x60] sm:$0xff]
  %v383 = vld [vmem:[%s6 + $0x68] sm:$0xff]
  %v384 = vld [vmem:[%s6 + $0x70] sm:$0xff]
  %v385 = vld [vmem:[%s6 + $0x78] sm:$0xff]
  %386 = vmatprep.subr.mxu0 0.0
  %387 = vmatpush1.msra.mxu0 %v370
  %388 = vmatprep.subr.mxu0 0.0
  %389 = vmatpush1.msra.mxu0 %v371
  %390 = vmatprep.subr.mxu0 0.0
  %391 = vmatpush1.msra.mxu0 %v372
  %392 = vmatprep.subr.mxu0 0.0
  %393 = vmatpush1.msra.mxu0 %v373
  %394 = vmatprep.subr.mxu0 0.0
  %395 = vmatpush1.msra.mxu0 0.0
  %396 = vmatprep.subr.mxu0 0.0
  %397 = vmatpush1.msra.mxu0 0.0
  %398 = vmatprep.subr.mxu0 0.0
  %399 = vmatpush1.msra.mxu0 0.0
  %400 = vmatprep.subr.mxu0 0.0
  %401 = vmatpush1.msra.mxu0 0.0
  %402 = vmatprep.subr.mxu0 0.0
  %403 = vmatpush1.msra.mxu0 0.0
  %404 = vmatprep.subr.mxu0 0.0
  %405 = vmatpush1.msra.mxu0 0.0
  %406 = vmatprep.subr.mxu0 0.0
  %407 = vmatpush1.msra.mxu0 0.0
  %408 = vmatprep.subr.mxu0 0.0
  %409 = vmatpush1.msra.mxu0 0.0
  %410 = vmatprep.subr.mxu0 0.0
  %411 = vmatpush1.msra.mxu0 0.0
  %412 = vmatprep.subr.mxu0 0.0
  %413 = vmatpush1.msra.mxu0 0.0
  %414 = vmatprep.subr.mxu0 0.0
  %415 = vmatpush1.msra.mxu0 0.0
  %416 = vmatprep.subr.mxu0 0.0
  %417 = vmatpush1.msra.mxu0 0.0
  %418 = vmatprep.subr.mxu0 0.0
  %419 = vmatpush1.msra.mxu0 0.0
  %420 = vmatprep.subr.mxu0 0.0
  %421 = vmatpush1.msra.mxu0 0.0
  %422 = vmatprep.subr.mxu0 0.0
  %423 = vmatpush1.msra.mxu0 0.0
  %424 = vmatprep.subr.mxu0 0.0
  %425 = vmatpush1.msra.mxu0 0.0
  %426 = vmatprep.subr.mxu0 0.0
  %427 = vmatpush1.msra.mxu0 0.0
  %428 = vmatprep.subr.mxu0 0.0
  %429 = vmatpush1.msra.mxu0 0.0
  %430 = vmatprep.subr.mxu0 0.0
  %431 = vmatpush1.msra.mxu0 0.0
  %432 = vmatprep.subr.mxu0 0.0
  %433 = vmatpush1.msra.mxu0 0.0
  %434 = vmatprep.subr.mxu0 0.0
  %435 = vmatpush1.msra.mxu0 0.0
  %436 = vmatprep.subr.mxu0 0.0
  %437 = vmatpush1.msra.mxu0 0.0
  %438 = vmatprep.subr.mxu0 0.0
  %439 = vmatpush1.msra.mxu0 0.0
  %440 = vmatprep.subr.mxu0 0.0
  %441 = vmatpush1.msra.mxu0 0.0
  %442 = vmatprep.subr.mxu0 0.0
  %443 = vmatpush1.msra.mxu0 0.0
  %444 = vmatprep.subr.mxu0 0.0
  %445 = vmatpush1.msra.mxu0 0.0
  %446 = vmatprep.subr.mxu0 0.0
  %447 = vmatpush1.msra.mxu0 0.0
  %448 = vmatprep.subr.mxu0 0.0
  %449 = vmatpush1.msra.mxu0 0.0
  %450 = vmatprep.mubr.f32.mxu0 0.0
  %451 = vmatmul.mubr.f32.gmra.mrb[0].mxu0 %v79
  %v452 = vpop.f32.mrb[0].mxu0
  %v453 = vadd.f32 0.0, %v452
  %v454 = vpop.f32.mrb[0].mxu0
  %455 = vdwg.mxu0
  %456 = vmatprep.subr.mxu0 0.0
  %457 = vmatpush1.msra.mxu0 %v374
  %458 = vmatprep.subr.mxu0 0.0
  %459 = vmatpush1.msra.mxu0 %v375
  %460 = vmatprep.subr.mxu0 0.0
  %461 = vmatpush1.msra.mxu0 %v376
  %462 = vmatprep.subr.mxu0 0.0
  %463 = vmatpush1.msra.mxu0 %v377
  %464 = vmatprep.subr.mxu0 0.0
  %465 = vmatpush1.msra.mxu0 0.0
  %466 = vmatprep.subr.mxu0 0.0
  %467 = vmatpush1.msra.mxu0 0.0
  %468 = vmatprep.subr.mxu0 0.0
  %469 = vmatpush1.msra.mxu0 0.0
  %470 = vmatprep.subr.mxu0 0.0
  %471 = vmatpush1.msra.mxu0 0.0
  %472 = vmatprep.subr.mxu0 0.0
  %473 = vmatpush1.msra.mxu0 0.0
  %474 = vmatprep.subr.mxu0 0.0
  %475 = vmatpush1.msra.mxu0 0.0
  %476 = vmatprep.subr.mxu0 0.0
  %477 = vmatpush1.msra.mxu0 0.0
  %478 = vmatprep.subr.mxu0 0.0
  %479 = vmatpush1.msra.mxu0 0.0
  %480 = vmatprep.subr.mxu0 0.0
  %481 = vmatpush1.msra.mxu0 0.0
  %482 = vmatprep.subr.mxu0 0.0
  %483 = vmatpush1.msra.mxu0 0.0
  %484 = vmatprep.subr.mxu0 0.0
  %485 = vmatpush1.msra.mxu0 0.0
  %486 = vmatprep.subr.mxu0 0.0
  %487 = vmatpush1.msra.mxu0 0.0
  %488 = vmatprep.subr.mxu0 0.0
  %489 = vmatpush1.msra.mxu0 0.0
  %490 = vmatprep.subr.mxu0 0.0
  %491 = vmatpush1.msra.mxu0 0.0
  %492 = vmatprep.subr.mxu0 0.0
  %493 = vmatpush1.msra.mxu0 0.0
  %494 = vmatprep.subr.mxu0 0.0
  %495 = vmatpush1.msra.mxu0 0.0
  %496 = vmatprep.subr.mxu0 0.0
  %497 = vmatpush1.msra.mxu0 0.0
  %498 = vmatprep.subr.mxu0 0.0
  %499 = vmatpush1.msra.mxu0 0.0
  %500 = vmatprep.subr.mxu0 0.0
  %501 = vmatpush1.msra.mxu0 0.0
  %502 = vmatprep.subr.mxu0 0.0
  %503 = vmatpush1.msra.mxu0 0.0
  %504 = vmatprep.subr.mxu0 0.0
  %505 = vmatpush1.msra.mxu0 0.0
  %506 = vmatprep.subr.mxu0 0.0
  %507 = vmatpush1.msra.mxu0 0.0
  %508 = vmatprep.subr.mxu0 0.0
  %509 = vmatpush1.msra.mxu0 0.0
  %510 = vmatprep.subr.mxu0 0.0
  %511 = vmatpush1.msra.mxu0 0.0
  %512 = vmatprep.subr.mxu0 0.0
  %513 = vmatpush1.msra.mxu0 0.0
  %514 = vmatprep.subr.mxu0 0.0
  %515 = vmatpush1.msra.mxu0 0.0
  %516 = vmatprep.subr.mxu0 0.0
  %517 = vmatpush1.msra.mxu0 0.0
  %518 = vmatprep.subr.mxu0 0.0
  %519 = vmatpush1.msra.mxu0 0.0
  %520 = vmatprep.mubr.f32.mxu0 0.0
  %521 = vmatmul.mubr.f32.gmra.mrb[0].mxu0 %v152
  %v522 = vpop.f32.mrb[0].mxu0
  %v523 = vadd.f32 0.0, %v522
  %v524 = vpop.f32.mrb[0].mxu0
  %525 = vdwg.mxu0
  %526 = vmatprep.subr.mxu0 0.0
  %527 = vmatpush1.msra.mxu0 %v378
  %528 = vmatprep.subr.mxu0 0.0
  %529 = vmatpush1.msra.mxu0 %v379
  %530 = vmatprep.subr.mxu0 0.0
  %531 = vmatpush1.msra.mxu0 %v380
  %532 = vmatprep.subr.mxu0 0.0
  %533 = vmatpush1.msra.mxu0 %v381
  %534 = vmatprep.subr.mxu0 0.0
  %535 = vmatpush1.msra.mxu0 0.0
  %536 = vmatprep.subr.mxu0 0.0
  %537 = vmatpush1.msra.mxu0 0.0
  %538 = vmatprep.subr.mxu0 0.0
  %539 = vmatpush1.msra.mxu0 0.0
  %540 = vmatprep.subr.mxu0 0.0
  %541 = vmatpush1.msra.mxu0 0.0
  %542 = vmatprep.subr.mxu0 0.0
  %543 = vmatpush1.msra.mxu0 0.0
  %544 = vmatprep.subr.mxu0 0.0
  %545 = vmatpush1.msra.mxu0 0.0
  %546 = vmatprep.subr.mxu0 0.0
  %547 = vmatpush1.msra.mxu0 0.0
  %548 = vmatprep.subr.mxu0 0.0
  %549 = vmatpush1.msra.mxu0 0.0
  %550 = vmatprep.subr.mxu0 0.0
  %551 = vmatpush1.msra.mxu0 0.0
  %552 = vmatprep.subr.mxu0 0.0
  %553 = vmatpush1.msra.mxu0 0.0
  %554 = vmatprep.subr.mxu0 0.0
  %555 = vmatpush1.msra.mxu0 0.0
  %556 = vmatprep.subr.mxu0 0.0
  %557 = vmatpush1.msra.mxu0 0.0
  %558 = vmatprep.subr.mxu0 0.0
  %559 = vmatpush1.msra.mxu0 0.0
  %560 = vmatprep.subr.mxu0 0.0
  %561 = vmatpush1.msra.mxu0 0.0
  %562 = vmatprep.subr.mxu0 0.0
  %563 = vmatpush1.msra.mxu0 0.0
  %564 = vmatprep.subr.mxu0 0.0
  %565 = vmatpush1.msra.mxu0 0.0
  %566 = vmatprep.subr.mxu0 0.0
  %567 = vmatpush1.msra.mxu0 0.0
  %568 = vmatprep.subr.mxu0 0.0
  %569 = vmatpush1.msra.mxu0 0.0
  %570 = vmatprep.subr.mxu0 0.0
  %571 = vmatpush1.msra.mxu0 0.0
  %572 = vmatprep.subr.mxu0 0.0
  %573 = vmatpush1.msra.mxu0 0.0
  %574 = vmatprep.subr.mxu0 0.0
  %575 = vmatpush1.msra.mxu0 0.0
  %576 = vmatprep.subr.mxu0 0.0
  %577 = vmatpush1.msra.mxu0 0.0
  %578 = vmatprep.subr.mxu0 0.0
  %579 = vmatpush1.msra.mxu0 0.0
  %580 = vmatprep.subr.mxu0 0.0
  %581 = vmatpush1.msra.mxu0 0.0
  %582 = vmatprep.subr.mxu0 0.0
  %583 = vmatpush1.msra.mxu0 0.0
  %584 = vmatprep.subr.mxu0 0.0
  %585 = vmatpush1.msra.mxu0 0.0
  %586 = vmatprep.subr.mxu0 0.0
  %587 = vmatpush1.msra.mxu0 0.0
  %588 = vmatprep.subr.mxu0 0.0
  %589 = vmatpush1.msra.mxu0 0.0
  %590 = vmatprep.mubr.f32.mxu0 0.0
  %591 = vmatmul.mubr.f32.gmra.mrb[0].mxu0 %v225
  %v592 = vpop.f32.mrb[0].mxu0
  %v593 = vadd.f32 0.0, %v592
  %v594 = vpop.f32.mrb[0].mxu0
  %595 = vdwg.mxu0
  %596 = vmatprep.subr.mxu0 0.0
  %597 = vmatpush1.msra.mxu0 %v382
  %598 = vmatprep.subr.mxu0 0.0
  %599 = vmatpush1.msra.mxu0 %v383
  %600 = vmatprep.subr.mxu0 0.0
  %601 = vmatpush1.msra.mxu0 %v384
  %602 = vmatprep.subr.mxu0 0.0
  %603 = vmatpush1.msra.mxu0 %v385
  %604 = vmatprep.subr.mxu0 0.0
  %605 = vmatpush1.msra.mxu0 0.0
  %606 = vmatprep.subr.mxu0 0.0
  %607 = vmatpush1.msra.mxu0 0.0
  %608 = vmatprep.subr.mxu0 0.0
  %609 = vmatpush1.msra.mxu0 0.0
  %610 = vmatprep.subr.mxu0 0.0
  %611 = vmatpush1.msra.mxu0 0.0
  %612 = vmatprep.subr.mxu0 0.0
  %613 = vmatpush1.msra.mxu0 0.0
  %614 = vmatprep.subr.mxu0 0.0
  %615 = vmatpush1.msra.mxu0 0.0
  %616 = vmatprep.subr.mxu0 0.0
  %617 = vmatpush1.msra.mxu0 0.0
  %618 = vmatprep.subr.mxu0 0.0
  %619 = vmatpush1.msra.mxu0 0.0
  %620 = vmatprep.subr.mxu0 0.0
  %621 = vmatpush1.msra.mxu0 0.0
  %622 = vmatprep.subr.mxu0 0.0
  %623 = vmatpush1.msra.mxu0 0.0
  %624 = vmatprep.subr.mxu0 0.0
  %625 = vmatpush1.msra.mxu0 0.0
  %626 = vmatprep.subr.mxu0 0.0
  %627 = vmatpush1.msra.mxu0 0.0
  %628 = vmatprep.subr.mxu0 0.0
  %629 = vmatpush1.msra.mxu0 0.0
  %630 = vmatprep.subr.mxu0 0.0
  %631 = vmatpush1.msra.mxu0 0.0
  %632 = vmatprep.subr.mxu0 0.0
  %633 = vmatpush1.msra.mxu0 0.0
  %634 = vmatprep.subr.mxu0 0.0
  %635 = vmatpush1.msra.mxu0 0.0
  %636 = vmatprep.subr.mxu0 0.0
  %637 = vmatpush1.msra.mxu0 0.0
  %638 = vmatprep.subr.mxu0 0.0
  %639 = vmatpush1.msra.mxu0 0.0
  %640 = vmatprep.subr.mxu0 0.0
  %641 = vmatpush1.msra.mxu0 0.0
  %642 = vmatprep.subr.mxu0 0.0
  %643 = vmatpush1.msra.mxu0 0.0
  %644 = vmatprep.subr.mxu0 0.0
  %645 = vmatpush1.msra.mxu0 0.0
  %646 = vmatprep.subr.mxu0 0.0
  %647 = vmatpush1.msra.mxu0 0.0
  %648 = vmatprep.subr.mxu0 0.0
  %649 = vmatpush1.msra.mxu0 0.0
  %650 = vmatprep.subr.mxu0 0.0
  %651 = vmatpush1.msra.mxu0 0.0
  %652 = vmatprep.subr.mxu0 0.0
  %653 = vmatpush1.msra.mxu0 0.0
  %654 = vmatprep.subr.mxu0 0.0
  %655 = vmatpush1.msra.mxu0 0.0
  %656 = vmatprep.subr.mxu0 0.0
  %657 = vmatpush1.msra.mxu0 0.0
  %658 = vmatprep.subr.mxu0 0.0
  %659 = vmatpush1.msra.mxu0 0.0
  %660 = vmatprep.mubr.f32.mxu0 0.0
  %661 = vmatmul.mubr.f32.gmra.mrb[0].mxu0 %v298
  %v662 = vpop.f32.mrb[0].mxu0
  %v663 = vadd.f32 0.0, %v662
  %v664 = vpop.f32.mrb[0].mxu0
  %665 = vdwg.mxu0
  %v666 = vld [vmem:[%s7] sm:$0xff]
  %v667 = vld [vmem:[%s7 + $0x8] sm:$0xff]
  %v668 = vld [vmem:[%s7 + $0x10] sm:$0xff]
  %v669 = vld [vmem:[%s7 + $0x18] sm:$0xff]
  %v670 = vld [vmem:[%s7 + $0x20] sm:$0xff]
  %v671 = vld [vmem:[%s7 + $0x28] sm:$0xff]
  %v672 = vld [vmem:[%s7 + $0x30] sm:$0xff]
  %v673 = vld [vmem:[%s7 + $0x38] sm:$0xff]
  %v674 = vld [vmem:[%s7 + $0x40] sm:$0xff]
  %v675 = vld [vmem:[%s7 + $0x48] sm:$0xff]
  %v676 = vld [vmem:[%s7 + $0x50] sm:$0xff]
  %v677 = vld [vmem:[%s7 + $0x58] sm:$0xff]
  %v678 = vld [vmem:[%s7 + $0x60] sm:$0xff]
  %v679 = vld [vmem:[%s7 + $0x68] sm:$0xff]
  %v680 = vld [vmem:[%s7 + $0x70] sm:$0xff]
  %v681 = vld [vmem:[%s7 + $0x78] sm:$0xff]
  %682 = vmatprep.subr.mxu0 0.0
  %683 = vmatpush1.msra.mxu0 %v666
  %684 = vmatprep.subr.mxu0 0.0
  %685 = vmatpush1.msra.mxu0 %v667
  %686 = vmatprep.subr.mxu0 0.0
  %687 = vmatpush1.msra.mxu0 %v668
  %688 = vmatprep.subr.mxu0 0.0
  %689 = vmatpush1.msra.mxu0 %v669
  %690 = vmatprep.subr.mxu0 0.0
  %691 = vmatpush1.msra.mxu0 0.0
  %692 = vmatprep.subr.mxu0 0.0
  %693 = vmatpush1.msra.mxu0 0.0
  %694 = vmatprep.subr.mxu0 0.0
  %695 = vmatpush1.msra.mxu0 0.0
  %696 = vmatprep.subr.mxu0 0.0
  %697 = vmatpush1.msra.mxu0 0.0
  %698 = vmatprep.subr.mxu0 0.0
  %699 = vmatpush1.msra.mxu0 0.0
  %700 = vmatprep.subr.mxu0 0.0
  %701 = vmatpush1.msra.mxu0 0.0
  %702 = vmatprep.subr.mxu0 0.0
  %703 = vmatpush1.msra.mxu0 0.0
  %704 = vmatprep.subr.mxu0 0.0
  %705 = vmatpush1.msra.mxu0 0.0
  %706 = vmatprep.subr.mxu0 0.0
  %707 = vmatpush1.msra.mxu0 0.0
  %708 = vmatprep.subr.mxu0 0.0
  %709 = vmatpush1.msra.mxu0 0.0
  %710 = vmatprep.subr.mxu0 0.0
  %711 = vmatpush1.msra.mxu0 0.0
  %712 = vmatprep.subr.mxu0 0.0
  %713 = vmatpush1.msra.mxu0 0.0
  %714 = vmatprep.subr.mxu0 0.0
  %715 = vmatpush1.msra.mxu0 0.0
  %716 = vmatprep.subr.mxu0 0.0
  %717 = vmatpush1.msra.mxu0 0.0
  %718 = vmatprep.subr.mxu0 0.0
  %719 = vmatpush1.msra.mxu0 0.0
  %720 = vmatprep.subr.mxu0 0.0
  %721 = vmatpush1.msra.mxu0 0.0
  %722 = vmatprep.subr.mxu0 0.0
  %723 = vmatpush1.msra.mxu0 0.0
  %724 = vmatprep.subr.mxu0 0.0
  %725 = vmatpush1.msra.mxu0 0.0
  %726 = vmatprep.subr.mxu0 0.0
  %727 = vmatpush1.msra.mxu0 0.0
  %728 = vmatprep.subr.mxu0 0.0
  %729 = vmatpush1.msra.mxu0 0.0
  %730 = vmatprep.subr.mxu0 0.0
  %731 = vmatpush1.msra.mxu0 0.0
  %732 = vmatprep.subr.mxu0 0.0
  %733 = vmatpush1.msra.mxu0 0.0
  %734 = vmatprep.subr.mxu0 0.0
  %735 = vmatpush1.msra.mxu0 0.0
  %736 = vmatprep.subr.mxu0 0.0
  %737 = vmatpush1.msra.mxu0 0.0
  %738 = vmatprep.subr.mxu0 0.0
  %739 = vmatpush1.msra.mxu0 0.0
  %740 = vmatprep.subr.mxu0 0.0
  %741 = vmatpush1.msra.mxu0 0.0
  %742 = vmatprep.subr.mxu0 0.0
  %743 = vmatpush1.msra.mxu0 0.0
  %744 = vmatprep.subr.mxu0 0.0
  %745 = vmatpush1.msra.mxu0 0.0
  %746 = vmatprep.mubr.f32.mxu0 0.0
  %747 = vmatmul.mubr.f32.gmra.mrb[0].mxu0 %v79
  %v748 = vpop.f32.mrb[0].mxu0
  %v749 = vadd.f32 0.0, %v748
  %v750 = vpop.f32.mrb[0].mxu0
  %751 = vdwg.mxu0
  %752 = vmatprep.subr.mxu0 0.0
  %753 = vmatpush1.msra.mxu0 %v670
  %754 = vmatprep.subr.mxu0 0.0
  %755 = vmatpush1.msra.mxu0 %v671
  %756 = vmatprep.subr.mxu0 0.0
  %757 = vmatpush1.msra.mxu0 %v672
  %758 = vmatprep.subr.mxu0 0.0
  %759 = vmatpush1.msra.mxu0 %v673
  %760 = vmatprep.subr.mxu0 0.0
  %761 = vmatpush1.msra.mxu0 0.0
  %762 = vmatprep.subr.mxu0 0.0
  %763 = vmatpush1.msra.mxu0 0.0
  %764 = vmatprep.subr.mxu0 0.0
  %765 = vmatpush1.msra.mxu0 0.0
  %766 = vmatprep.subr.mxu0 0.0
  %767 = vmatpush1.msra.mxu0 0.0
  %768 = vmatprep.subr.mxu0 0.0
  %769 = vmatpush1.msra.mxu0 0.0
  %770 = vmatprep.subr.mxu0 0.0
  %771 = vmatpush1.msra.mxu0 0.0
  %772 = vmatprep.subr.mxu0 0.0
  %773 = vmatpush1.msra.mxu0 0.0
  %774 = vmatprep.subr.mxu0 0.0
  %775 = vmatpush1.msra.mxu0 0.0
  %776 = vmatprep.subr.mxu0 0.0
  %777 = vmatpush1.msra.mxu0 0.0
  %778 = vmatprep.subr.mxu0 0.0
  %779 = vmatpush1.msra.mxu0 0.0
  %780 = vmatprep.subr.mxu0 0.0
  %781 = vmatpush1.msra.mxu0 0.0
  %782 = vmatprep.subr.mxu0 0.0
  %783 = vmatpush1.msra.mxu0 0.0
  %784 = vmatprep.subr.mxu0 0.0
  %785 = vmatpush1.msra.mxu0 0.0
  %786 = vmatprep.subr.mxu0 0.0
  %787 = vmatpush1.msra.mxu0 0.0
  %788 = vmatprep.subr.mxu0 0.0
  %789 = vmatpush1.msra.mxu0 0.0
  %790 = vmatprep.subr.mxu0 0.0
  %791 = vmatpush1.msra.mxu0 0.0
  %792 = vmatprep.subr.mxu0 0.0
  %793 = vmatpush1.msra.mxu0 0.0
  %794 = vmatprep.subr.mxu0 0.0
  %795 = vmatpush1.msra.mxu0 0.0
  %796 = vmatprep.subr.mxu0 0.0
  %797 = vmatpush1.msra.mxu0 0.0
  %798 = vmatprep.subr.mxu0 0.0
  %799 = vmatpush1.msra.mxu0 0.0
  %800 = vmatprep.subr.mxu0 0.0
  %801 = vmatpush1.msra.mxu0 0.0
  %802 = vmatprep.subr.mxu0 0.0
  %803 = vmatpush1.msra.mxu0 0.0
  %804 = vmatprep.subr.mxu0 0.0
  %805 = vmatpush1.msra.mxu0 0.0
  %806 = vmatprep.subr.mxu0 0.0
  %807 = vmatpush1.msra.mxu0 0.0
  %808 = vmatprep.subr.mxu0 0.0
  %809 = vmatpush1.msra.mxu0 0.0
  %810 = vmatprep.subr.mxu0 0.0
  %811 = vmatpush1.msra.mxu0 0.0
  %812 = vmatprep.subr.mxu0 0.0
  %813 = vmatpush1.msra.mxu0 0.0
  %814 = vmatprep.subr.mxu0 0.0
  %815 = vmatpush1.msra.mxu0 0.0
  %816 = vmatprep.mubr.f32.mxu0 0.0
  %817 = vmatmul.mubr.f32.gmra.mrb[0].mxu0 %v152
  %v818 = vpop.f32.mrb[0].mxu0
  %v819 = vadd.f32 0.0, %v818
  %v820 = vpop.f32.mrb[0].mxu0
  %821 = vdwg.mxu0
  %822 = vmatprep.subr.mxu0 0.0
  %823 = vmatpush1.msra.mxu0 %v674
  %824 = vmatprep.subr.mxu0 0.0
  %825 = vmatpush1.msra.mxu0 %v675
  %826 = vmatprep.subr.mxu0 0.0
  %827 = vmatpush1.msra.mxu0 %v676
  %828 = vmatprep.subr.mxu0 0.0
  %829 = vmatpush1.msra.mxu0 %v677
  %830 = vmatprep.subr.mxu0 0.0
  %831 = vmatpush1.msra.mxu0 0.0
  %832 = vmatprep.subr.mxu0 0.0
  %833 = vmatpush1.msra.mxu0 0.0
  %834 = vmatprep.subr.mxu0 0.0
  %835 = vmatpush1.msra.mxu0 0.0
  %836 = vmatprep.subr.mxu0 0.0
  %837 = vmatpush1.msra.mxu0 0.0
  %838 = vmatprep.subr.mxu0 0.0
  %839 = vmatpush1.msra.mxu0 0.0
  %840 = vmatprep.subr.mxu0 0.0
  %841 = vmatpush1.msra.mxu0 0.0
  %842 = vmatprep.subr.mxu0 0.0
  %843 = vmatpush1.msra.mxu0 0.0
  %844 = vmatprep.subr.mxu0 0.0
  %845 = vmatpush1.msra.mxu0 0.0
  %846 = vmatprep.subr.mxu0 0.0
  %847 = vmatpush1.msra.mxu0 0.0
  %848 = vmatprep.subr.mxu0 0.0
  %849 = vmatpush1.msra.mxu0 0.0
  %850 = vmatprep.subr.mxu0 0.0
  %851 = vmatpush1.msra.mxu0 0.0
  %852 = vmatprep.subr.mxu0 0.0
  %853 = vmatpush1.msra.mxu0 0.0
  %854 = vmatprep.subr.mxu0 0.0
  %855 = vmatpush1.msra.mxu0 0.0
  %856 = vmatprep.subr.mxu0 0.0
  %857 = vmatpush1.msra.mxu0 0.0
  %858 = vmatprep.subr.mxu0 0.0
  %859 = vmatpush1.msra.mxu0 0.0
  %860 = vmatprep.subr.mxu0 0.0
  %861 = vmatpush1.msra.mxu0 0.0
  %862 = vmatprep.subr.mxu0 0.0
  %863 = vmatpush1.msra.mxu0 0.0
  %864 = vmatprep.subr.mxu0 0.0
  %865 = vmatpush1.msra.mxu0 0.0
  %866 = vmatprep.subr.mxu0 0.0
  %867 = vmatpush1.msra.mxu0 0.0
  %868 = vmatprep.subr.mxu0 0.0
  %869 = vmatpush1.msra.mxu0 0.0
  %870 = vmatprep.subr.mxu0 0.0
  %871 = vmatpush1.msra.mxu0 0.0
  %872 = vmatprep.subr.mxu0 0.0
  %873 = vmatpush1.msra.mxu0 0.0
  %874 = vmatprep.subr.mxu0 0.0
  %875 = vmatpush1.msra.mxu0 0.0
  %876 = vmatprep.subr.mxu0 0.0
  %877 = vmatpush1.msra.mxu0 0.0
  %878 = vmatprep.subr.mxu0 0.0
  %879 = vmatpush1.msra.mxu0 0.0
  %880 = vmatprep.subr.mxu0 0.0
  %881 = vmatpush1.msra.mxu0 0.0
  %882 = vmatprep.subr.mxu0 0.0
  %883 = vmatpush1.msra.mxu0 0.0
  %884 = vmatprep.subr.mxu0 0.0
  %885 = vmatpush1.msra.mxu0 0.0
  %886 = vmatprep.mubr.f32.mxu0 0.0
  %887 = vmatmul.mubr.f32.gmra.mrb[0].mxu0 %v225
  %v888 = vpop.f32.mrb[0].mxu0
  %v889 = vadd.f32 0.0, %v888
  %v890 = vpop.f32.mrb[0].mxu0
  %891 = vdwg.mxu0
  %892 = vmatprep.subr.mxu0 0.0
  %893 = vmatpush1.msra.mxu0 %v678
  %894 = vmatprep.subr.mxu0 0.0
  %895 = vmatpush1.msra.mxu0 %v679
  %896 = vmatprep.subr.mxu0 0.0
  %897 = vmatpush1.msra.mxu0 %v680
  %898 = vmatprep.subr.mxu0 0.0
  %899 = vmatpush1.msra.mxu0 %v681
  %900 = vmatprep.subr.mxu0 0.0
  %901 = vmatpush1.msra.mxu0 0.0
  %902 = vmatprep.subr.mxu0 0.0
  %903 = vmatpush1.msra.mxu0 0.0
  %904 = vmatprep.subr.mxu0 0.0
  %905 = vmatpush1.msra.mxu0 0.0
  %906 = vmatprep.subr.mxu0 0.0
  %907 = vmatpush1.msra.mxu0 0.0
  %908 = vmatprep.subr.mxu0 0.0
  %909 = vmatpush1.msra.mxu0 0.0
  %910 = vmatprep.subr.mxu0 0.0
  %911 = vmatpush1.msra.mxu0 0.0
  %912 = vmatprep.subr.mxu0 0.0
  %913 = vmatpush1.msra.mxu0 0.0
  %914 = vmatprep.subr.mxu0 0.0
  %915 = vmatpush1.msra.mxu0 0.0
  %916 = vmatprep.subr.mxu0 0.0
  %917 = vmatpush1.msra.mxu0 0.0
  %918 = vmatprep.subr.mxu0 0.0
  %919 = vmatpush1.msra.mxu0 0.0
  %920 = vmatprep.subr.mxu0 0.0
  %921 = vmatpush1.msra.mxu0 0.0
  %922 = vmatprep.subr.mxu0 0.0
  %923 = vmatpush1.msra.mxu0 0.0
  %924 = vmatprep.subr.mxu0 0.0
  %925 = vmatpush1.msra.mxu0 0.0
  %926 = vmatprep.subr.mxu0 0.0
  %927 = vmatpush1.msra.mxu0 0.0
  %928 = vmatprep.subr.mxu0 0.0
  %929 = vmatpush1.msra.mxu0 0.0
  %930 = vmatprep.subr.mxu0 0.0
  %931 = vmatpush1.msra.mxu0 0.0
  %932 = vmatprep.subr.mxu0 0.0
  %933 = vmatpush1.msra.mxu0 0.0
  %934 = vmatprep.subr.mxu0 0.0
  %935 = vmatpush1.msra.mxu0 0.0
  %936 = vmatprep.subr.mxu0 0.0
  %937 = vmatpush1.msra.mxu0 0.0
  %938 = vmatprep.subr.mxu0 0.0
  %939 = vmatpush1.msra.mxu0 0.0
  %940 = vmatprep.subr.mxu0 0.0
  %941 = vmatpush1.msra.mxu0 0.0
  %942 = vmatprep.subr.mxu0 0.0
  %943 = vmatpush1.msra.mxu0 0.0
  %944 = vmatprep.subr.mxu0 0.0
  %945 = vmatpush1.msra.mxu0 0.0
  %946 = vmatprep.subr.mxu0 0.0
  %947 = vmatpush1.msra.mxu0 0.0
  %948 = vmatprep.subr.mxu0 0.0
  %949 = vmatpush1.msra.mxu0 0.0
  %950 = vmatprep.subr.mxu0 0.0
  %951 = vmatpush1.msra.mxu0 0.0
  %952 = vmatprep.subr.mxu0 0.0
  %953 = vmatpush1.msra.mxu0 0.0
  %954 = vmatprep.subr.mxu0 0.0
  %955 = vmatpush1.msra.mxu0 0.0
  %956 = vmatprep.mubr.f32.mxu0 0.0
  %957 = vmatmul.mubr.f32.gmra.mrb[0].mxu0 %v298
  %v958 = vpop.f32.mrb[0].mxu0
  %v959 = vadd.f32 0.0, %v958
  %v960 = vpop.f32.mrb[0].mxu0
  %961 = vdwg.mxu0
  %vm962 = vcmask 130048
  %v964 = vsel %vm962, %v29, 0
  %966 = vmatprep.subr.mxu0 0.0
  %967 = vmatpush1.msra.mxu0 %v37
  %968 = vmatprep.subr.mxu0 0.0
  %969 = vmatpush1.msra.mxu0 %v38
  %970 = vmatprep.subr.mxu0 0.0
  %971 = vmatpush1.msra.mxu0 0.0
  %972 = vmatprep.subr.mxu0 0.0
  %973 = vmatpush1.msra.mxu0 0.0
  %974 = vmatprep.subr.mxu0 0.0
  %975 = vmatpush1.msra.mxu0 0.0
  %976 = vmatprep.subr.mxu0 0.0
  %977 = vmatpush1.msra.mxu0 0.0
  %978 = vmatprep.subr.mxu0 0.0
  %979 = vmatpush1.msra.mxu0 0.0
  %980 = vmatprep.subr.mxu0 0.0
  %981 = vmatpush1.msra.mxu0 0.0
  %982 = vmatprep.subr.mxu0 0.0
  %983 = vmatpush1.msra.mxu0 0.0
  %984 = vmatprep.subr.mxu0 0.0
  %985 = vmatpush1.msra.mxu0 0.0
  %986 = vmatprep.subr.mxu0 0.0
  %987 = vmatpush1.msra.mxu0 0.0
  %988 = vmatprep.subr.mxu0 0.0
  %989 = vmatpush1.msra.mxu0 0.0
  %990 = vmatprep.subr.mxu0 0.0
  %991 = vmatpush1.msra.mxu0 0.0
  %992 = vmatprep.subr.mxu0 0.0
  %993 = vmatpush1.msra.mxu0 0.0
  %994 = vmatprep.subr.mxu0 0.0
  %995 = vmatpush1.msra.mxu0 0.0
  %996 = vmatprep.subr.mxu0 0.0
  %997 = vmatpush1.msra.mxu0 0.0
  %998 = vmatprep.subr.mxu0 0.0
  %999 = vmatpush1.msra.mxu0 0.0
  %1000 = vmatprep.subr.mxu0 0.0
  %1001 = vmatpush1.msra.mxu0 0.0
  %1002 = vmatprep.subr.mxu0 0.0
  %1003 = vmatpush1.msra.mxu0 0.0
  %1004 = vmatprep.subr.mxu0 0.0
  %1005 = vmatpush1.msra.mxu0 0.0
  %1006 = vmatprep.subr.mxu0 0.0
  %1007 = vmatpush1.msra.mxu0 0.0
  %1008 = vmatprep.subr.mxu0 0.0
  %1009 = vmatpush1.msra.mxu0 0.0
  %1010 = vmatprep.subr.mxu0 0.0
  %1011 = vmatpush1.msra.mxu0 0.0
  %1012 = vmatprep.subr.mxu0 0.0
  %1013 = vmatpush1.msra.mxu0 0.0
  %1014 = vmatprep.subr.mxu0 0.0
  %1015 = vmatpush1.msra.mxu0 0.0
  %1016 = vmatprep.subr.mxu0 0.0
  %1017 = vmatpush1.msra.mxu0 0.0
  %1018 = vmatprep.subr.mxu0 0.0
  %1019 = vmatpush1.msra.mxu0 0.0
  %1020 = vmatprep.subr.mxu0 0.0
  %1021 = vmatpush1.msra.mxu0 0.0
  %1022 = vmatprep.subr.mxu0 0.0
  %1023 = vmatpush1.msra.mxu0 0.0
  %1024 = vmatprep.subr.mxu0 0.0
  %1025 = vmatpush1.msra.mxu0 0.0
  %1026 = vmatprep.subr.mxu0 0.0
  %1027 = vmatpush1.msra.mxu0 0.0
  %1028 = vmatprep.subr.mxu0 0.0
  %1029 = vmatpush1.msra.mxu0 0.0
  %1030 = vmatprep.mubr.f32.mxu0 0.0
  %1031 = vmatmul.mubr.f32.gmra.mrb[0].mxu0 %v964
  %v1032 = vpop.f32.mrb[0].mxu0
  %v1033 = vadd.f32 %v148, %v1032
  %v1034 = vpop.f32.mrb[0].mxu0
  %1035 = vdwg.mxu0
  %v1037 = vsel %vm962, %v30, 0
  %1039 = vmatprep.subr.mxu0 0.0
  %1040 = vmatpush1.msra.mxu0 %v39
  %1041 = vmatprep.subr.mxu0 0.0
  %1042 = vmatpush1.msra.mxu0 %v40
  %1043 = vmatprep.subr.mxu0 0.0
  %1044 = vmatpush1.msra.mxu0 0.0
  %1045 = vmatprep.subr.mxu0 0.0
  %1046 = vmatpush1.msra.mxu0 0.0
  %1047 = vmatprep.subr.mxu0 0.0
  %1048 = vmatpush1.msra.mxu0 0.0
  %1049 = vmatprep.subr.mxu0 0.0
  %1050 = vmatpush1.msra.mxu0 0.0
  %1051 = vmatprep.subr.mxu0 0.0
  %1052 = vmatpush1.msra.mxu0 0.0
  %1053 = vmatprep.subr.mxu0 0.0
  %1054 = vmatpush1.msra.mxu0 0.0
  %1055 = vmatprep.subr.mxu0 0.0
  %1056 = vmatpush1.msra.mxu0 0.0
  %1057 = vmatprep.subr.mxu0 0.0
  %1058 = vmatpush1.msra.mxu0 0.0
  %1059 = vmatprep.subr.mxu0 0.0
  %1060 = vmatpush1.msra.mxu0 0.0
  %1061 = vmatprep.subr.mxu0 0.0
  %1062 = vmatpush1.msra.mxu0 0.0
  %1063 = vmatprep.subr.mxu0 0.0
  %1064 = vmatpush1.msra.mxu0 0.0
  %1065 = vmatprep.subr.mxu0 0.0
  %1066 = vmatpush1.msra.mxu0 0.0
  %1067 = vmatprep.subr.mxu0 0.0
  %1068 = vmatpush1.msra.mxu0 0.0
  %1069 = vmatprep.subr.mxu0 0.0
  %1070 = vmatpush1.msra.mxu0 0.0
  %1071 = vmatprep.subr.mxu0 0.0
  %1072 = vmatpush1.msra.mxu0 0.0
  %1073 = vmatprep.subr.mxu0 0.0
  %1074 = vmatpush1.msra.mxu0 0.0
  %1075 = vmatprep.subr.mxu0 0.0
  %1076 = vmatpush1.msra.mxu0 0.0
  %1077 = vmatprep.subr.mxu0 0.0
  %1078 = vmatpush1.msra.mxu0 0.0
  %1079 = vmatprep.subr.mxu0 0.0
  %1080 = vmatpush1.msra.mxu0 0.0
  %1081 = vmatprep.subr.mxu0 0.0
  %1082 = vmatpush1.msra.mxu0 0.0
  %1083 = vmatprep.subr.mxu0 0.0
  %1084 = vmatpush1.msra.mxu0 0.0
  %1085 = vmatprep.subr.mxu0 0.0
  %1086 = vmatpush1.msra.mxu0 0.0
  %1087 = vmatprep.subr.mxu0 0.0
  %1088 = vmatpush1.msra.mxu0 0.0
  %1089 = vmatprep.subr.mxu0 0.0
  %1090 = vmatpush1.msra.mxu0 0.0
  %1091 = vmatprep.subr.mxu0 0.0
  %1092 = vmatpush1.msra.mxu0 0.0
  %1093 = vmatprep.subr.mxu0 0.0
  %1094 = vmatpush1.msra.mxu0 0.0
  %1095 = vmatprep.subr.mxu0 0.0
  %1096 = vmatpush1.msra.mxu0 0.0
  %1097 = vmatprep.subr.mxu0 0.0
  %1098 = vmatpush1.msra.mxu0 0.0
  %1099 = vmatprep.subr.mxu0 0.0
  %1100 = vmatpush1.msra.mxu0 0.0
  %1101 = vmatprep.subr.mxu0 0.0
  %1102 = vmatpush1.msra.mxu0 0.0
  %1103 = vmatprep.mubr.f32.mxu0 0.0
  %1104 = vmatmul.mubr.f32.gmra.mrb[0].mxu0 %v1037
  %v1105 = vpop.f32.mrb[0].mxu0
  %v1106 = vadd.f32 %v221, %v1105
  %v1107 = vpop.f32.mrb[0].mxu0
  %1108 = vdwg.mxu0
  %v1110 = vsel %vm962, %v31, 0
  %1112 = vmatprep.subr.mxu0 0.0
  %1113 = vmatpush1.msra.mxu0 %v41
  %1114 = vmatprep.subr.mxu0 0.0
  %1115 = vmatpush1.msra.mxu0 %v42
  %1116 = vmatprep.subr.mxu0 0.0
  %1117 = vmatpush1.msra.mxu0 0.0
  %1118 = vmatprep.subr.mxu0 0.0
  %1119 = vmatpush1.msra.mxu0 0.0
  %1120 = vmatprep.subr.mxu0 0.0
  %1121 = vmatpush1.msra.mxu0 0.0
  %1122 = vmatprep.subr.mxu0 0.0
  %1123 = vmatpush1.msra.mxu0 0.0
  %1124 = vmatprep.subr.mxu0 0.0
  %1125 = vmatpush1.msra.mxu0 0.0
  %1126 = vmatprep.subr.mxu0 0.0
  %1127 = vmatpush1.msra.mxu0 0.0
  %1128 = vmatprep.subr.mxu0 0.0
  %1129 = vmatpush1.msra.mxu0 0.0
  %1130 = vmatprep.subr.mxu0 0.0
  %1131 = vmatpush1.msra.mxu0 0.0
  %1132 = vmatprep.subr.mxu0 0.0
  %1133 = vmatpush1.msra.mxu0 0.0
  %1134 = vmatprep.subr.mxu0 0.0
  %1135 = vmatpush1.msra.mxu0 0.0
  %1136 = vmatprep.subr.mxu0 0.0
  %1137 = vmatpush1.msra.mxu0 0.0
  %1138 = vmatprep.subr.mxu0 0.0
  %1139 = vmatpush1.msra.mxu0 0.0
  %1140 = vmatprep.subr.mxu0 0.0
  %1141 = vmatpush1.msra.mxu0 0.0
  %1142 = vmatprep.subr.mxu0 0.0
  %1143 = vmatpush1.msra.mxu0 0.0
  %1144 = vmatprep.subr.mxu0 0.0
  %1145 = vmatpush1.msra.mxu0 0.0
  %1146 = vmatprep.subr.mxu0 0.0
  %1147 = vmatpush1.msra.mxu0 0.0
  %1148 = vmatprep.subr.mxu0 0.0
  %1149 = vmatpush1.msra.mxu0 0.0
  %1150 = vmatprep.subr.mxu0 0.0
  %1151 = vmatpush1.msra.mxu0 0.0
  %1152 = vmatprep.subr.mxu0 0.0
  %1153 = vmatpush1.msra.mxu0 0.0
  %1154 = vmatprep.subr.mxu0 0.0
  %1155 = vmatpush1.msra.mxu0 0.0
  %1156 = vmatprep.subr.mxu0 0.0
  %1157 = vmatpush1.msra.mxu0 0.0
  %1158 = vmatprep.subr.mxu0 0.0
  %1159 = vmatpush1.msra.mxu0 0.0
  %1160 = vmatprep.subr.mxu0 0.0
  %1161 = vmatpush1.msra.mxu0 0.0
  %1162 = vmatprep.subr.mxu0 0.0
  %1163 = vmatpush1.msra.mxu0 0.0
  %1164 = vmatprep.subr.mxu0 0.0
  %1165 = vmatpush1.msra.mxu0 0.0
  %1166 = vmatprep.subr.mxu0 0.0
  %1167 = vmatpush1.msra.mxu0 0.0
  %1168 = vmatprep.subr.mxu0 0.0
  %1169 = vmatpush1.msra.mxu0 0.0
  %1170 = vmatprep.subr.mxu0 0.0
  %1171 = vmatpush1.msra.mxu0 0.0
  %1172 = vmatprep.subr.mxu0 0.0
  %1173 = vmatpush1.msra.mxu0 0.0
  %1174 = vmatprep.subr.mxu0 0.0
  %1175 = vmatpush1.msra.mxu0 0.0
  %1176 = vmatprep.mubr.f32.mxu0 0.0
  %1177 = vmatmul.mubr.f32.gmra.mrb[0].mxu0 %v1110
  %v1178 = vpop.f32.mrb[0].mxu0
  %v1179 = vadd.f32 %v294, %v1178
  %v1180 = vpop.f32.mrb[0].mxu0
  %1181 = vdwg.mxu0
  %v1183 = vsel %vm962, %v32, 0
  %1185 = vmatprep.subr.mxu0 0.0
  %1186 = vmatpush1.msra.mxu0 %v43
  %1187 = vmatprep.subr.mxu0 0.0
  %1188 = vmatpush1.msra.mxu0 %v44
  %1189 = vmatprep.subr.mxu0 0.0
  %1190 = vmatpush1.msra.mxu0 0.0
  %1191 = vmatprep.subr.mxu0 0.0
  %1192 = vmatpush1.msra.mxu0 0.0
  %1193 = vmatprep.subr.mxu0 0.0
  %1194 = vmatpush1.msra.mxu0 0.0
  %1195 = vmatprep.subr.mxu0 0.0
  %1196 = vmatpush1.msra.mxu0 0.0
  %1197 = vmatprep.subr.mxu0 0.0
  %1198 = vmatpush1.msra.mxu0 0.0
  %1199 = vmatprep.subr.mxu0 0.0
  %1200 = vmatpush1.msra.mxu0 0.0
  %1201 = vmatprep.subr.mxu0 0.0
  %1202 = vmatpush1.msra.mxu0 0.0
  %1203 = vmatprep.subr.mxu0 0.0
  %1204 = vmatpush1.msra.mxu0 0.0
  %1205 = vmatprep.subr.mxu0 0.0
  %1206 = vmatpush1.msra.mxu0 0.0
  %1207 = vmatprep.subr.mxu0 0.0
  %1208 = vmatpush1.msra.mxu0 0.0
  %1209 = vmatprep.subr.mxu0 0.0
  %1210 = vmatpush1.msra.mxu0 0.0
  %1211 = vmatprep.subr.mxu0 0.0
  %1212 = vmatpush1.msra.mxu0 0.0
  %1213 = vmatprep.subr.mxu0 0.0
  %1214 = vmatpush1.msra.mxu0 0.0
  %1215 = vmatprep.subr.mxu0 0.0
  %1216 = vmatpush1.msra.mxu0 0.0
  %1217 = vmatprep.subr.mxu0 0.0
  %1218 = vmatpush1.msra.mxu0 0.0
  %1219 = vmatprep.subr.mxu0 0.0
  %1220 = vmatpush1.msra.mxu0 0.0
  %1221 = vmatprep.subr.mxu0 0.0
  %1222 = vmatpush1.msra.mxu0 0.0
  %1223 = vmatprep.subr.mxu0 0.0
  %1224 = vmatpush1.msra.mxu0 0.0
  %1225 = vmatprep.subr.mxu0 0.0
  %1226 = vmatpush1.msra.mxu0 0.0
  %1227 = vmatprep.subr.mxu0 0.0
  %1228 = vmatpush1.msra.mxu0 0.0
  %1229 = vmatprep.subr.mxu0 0.0
  %1230 = vmatpush1.msra.mxu0 0.0
  %1231 = vmatprep.subr.mxu0 0.0
  %1232 = vmatpush1.msra.mxu0 0.0
  %1233 = vmatprep.subr.mxu0 0.0
  %1234 = vmatpush1.msra.mxu0 0.0
  %1235 = vmatprep.subr.mxu0 0.0
  %1236 = vmatpush1.msra.mxu0 0.0
  %1237 = vmatprep.subr.mxu0 0.0
  %1238 = vmatpush1.msra.mxu0 0.0
  %1239 = vmatprep.subr.mxu0 0.0
  %1240 = vmatpush1.msra.mxu0 0.0
  %1241 = vmatprep.subr.mxu0 0.0
  %1242 = vmatpush1.msra.mxu0 0.0
  %1243 = vmatprep.subr.mxu0 0.0
  %1244 = vmatpush1.msra.mxu0 0.0
  %1245 = vmatprep.subr.mxu0 0.0
  %1246 = vmatpush1.msra.mxu0 0.0
  %1247 = vmatprep.subr.mxu0 0.0
  %1248 = vmatpush1.msra.mxu0 0.0
  %1249 = vmatprep.mubr.f32.mxu0 0.0
  %1250 = vmatmul.mubr.f32.gmra.mrb[0].mxu0 %v1183
  %v1251 = vpop.f32.mrb[0].mxu0
  %v1252 = vadd.f32 %v367, %v1251
  %v1253 = vpop.f32.mrb[0].mxu0
  %1254 = vdwg.mxu0
  %v1255 = vxor.u32 %v1033, 2147483648
  %v1256 = vxor.u32 %v1106, 2147483648
  %v1257 = vxor.u32 %v1179, 2147483648
  %v1258 = vxor.u32 %v1252, 2147483648
  %v1259 = vmul.f32 %v1255, 1.442695
  %v1260 = vpow.pop %v1259
  %v1261 = vmul.f32 %v1256, 1.442695
  %v1262 = vpow.pop %v1261
  %v1263 = vmul.f32 %v1257, 1.442695
  %v1264 = vpow.pop %v1263
  %v1265 = vmul.f32 %v1258, 1.442695
  %v1266 = vpow.pop %v1265
  %v1267 = vadd.f32 %v1260, 1.0
  %v1268 = vadd.f32 %v1262, 1.0
  %v1269 = vadd.f32 %v1264, 1.0
  %v1270 = vadd.f32 %v1266, 1.0
  %v1271 = vrcp.pop %v1267
  %v1272 = vmul.f32 1.0, %v1271
  %v1273 = vrcp.pop %v1268
  %v1274 = vmul.f32 1.0, %v1273
  %v1275 = vrcp.pop %v1269
  %v1276 = vmul.f32 1.0, %v1275
  %v1277 = vrcp.pop %v1270
  %v1278 = vmul.f32 1.0, %v1277
  %1279 = vmatprep.subr.mxu0 0.0
  %1280 = vmatpush1.msra.mxu0 %v45
  %1281 = vmatprep.subr.mxu0 0.0
  %1282 = vmatpush1.msra.mxu0 %v46
  %1283 = vmatprep.subr.mxu0 0.0
  %1284 = vmatpush1.msra.mxu0 0.0
  %1285 = vmatprep.subr.mxu0 0.0
  %1286 = vmatpush1.msra.mxu0 0.0
  %1287 = vmatprep.subr.mxu0 0.0
  %1288 = vmatpush1.msra.mxu0 0.0
  %1289 = vmatprep.subr.mxu0 0.0
  %1290 = vmatpush1.msra.mxu0 0.0
  %1291 = vmatprep.subr.mxu0 0.0
  %1292 = vmatpush1.msra.mxu0 0.0
  %1293 = vmatprep.subr.mxu0 0.0
  %1294 = vmatpush1.msra.mxu0 0.0
  %1295 = vmatprep.subr.mxu0 0.0
  %1296 = vmatpush1.msra.mxu0 0.0
  %1297 = vmatprep.subr.mxu0 0.0
  %1298 = vmatpush1.msra.mxu0 0.0
  %1299 = vmatprep.subr.mxu0 0.0
  %1300 = vmatpush1.msra.mxu0 0.0
  %1301 = vmatprep.subr.mxu0 0.0
  %1302 = vmatpush1.msra.mxu0 0.0
  %1303 = vmatprep.subr.mxu0 0.0
  %1304 = vmatpush1.msra.mxu0 0.0
  %1305 = vmatprep.subr.mxu0 0.0
  %1306 = vmatpush1.msra.mxu0 0.0
  %1307 = vmatprep.subr.mxu0 0.0
  %1308 = vmatpush1.msra.mxu0 0.0
  %1309 = vmatprep.subr.mxu0 0.0
  %1310 = vmatpush1.msra.mxu0 0.0
  %1311 = vmatprep.subr.mxu0 0.0
  %1312 = vmatpush1.msra.mxu0 0.0
  %1313 = vmatprep.subr.mxu0 0.0
  %1314 = vmatpush1.msra.mxu0 0.0
  %1315 = vmatprep.subr.mxu0 0.0
  %1316 = vmatpush1.msra.mxu0 0.0
  %1317 = vmatprep.subr.mxu0 0.0
  %1318 = vmatpush1.msra.mxu0 0.0
  %1319 = vmatprep.subr.mxu0 0.0
  %1320 = vmatpush1.msra.mxu0 0.0
  %1321 = vmatprep.subr.mxu0 0.0
  %1322 = vmatpush1.msra.mxu0 0.0
  %1323 = vmatprep.subr.mxu0 0.0
  %1324 = vmatpush1.msra.mxu0 0.0
  %1325 = vmatprep.subr.mxu0 0.0
  %1326 = vmatpush1.msra.mxu0 0.0
  %1327 = vmatprep.subr.mxu0 0.0
  %1328 = vmatpush1.msra.mxu0 0.0
  %1329 = vmatprep.subr.mxu0 0.0
  %1330 = vmatpush1.msra.mxu0 0.0
  %1331 = vmatprep.subr.mxu0 0.0
  %1332 = vmatpush1.msra.mxu0 0.0
  %1333 = vmatprep.subr.mxu0 0.0
  %1334 = vmatpush1.msra.mxu0 0.0
  %1335 = vmatprep.subr.mxu0 0.0
  %1336 = vmatpush1.msra.mxu0 0.0
  %1337 = vmatprep.subr.mxu0 0.0
  %1338 = vmatpush1.msra.mxu0 0.0
  %1339 = vmatprep.subr.mxu0 0.0
  %1340 = vmatpush1.msra.mxu0 0.0
  %1341 = vmatprep.subr.mxu0 0.0
  %1342 = vmatpush1.msra.mxu0 0.0
  %1343 = vmatprep.mubr.f32.mxu0 0.0
  %1344 = vmatmul.mubr.f32.gmra.mrb[0].mxu0 %v964
  %v1345 = vpop.f32.mrb[0].mxu0
  %v1346 = vadd.f32 %v453, %v1345
  %v1347 = vpop.f32.mrb[0].mxu0
  %1348 = vdwg.mxu0
  %1349 = vmatprep.subr.mxu0 0.0
  %1350 = vmatpush1.msra.mxu0 %v47
  %1351 = vmatprep.subr.mxu0 0.0
  %1352 = vmatpush1.msra.mxu0 %v48
  %1353 = vmatprep.subr.mxu0 0.0
  %1354 = vmatpush1.msra.mxu0 0.0
  %1355 = vmatprep.subr.mxu0 0.0
  %1356 = vmatpush1.msra.mxu0 0.0
  %1357 = vmatprep.subr.mxu0 0.0
  %1358 = vmatpush1.msra.mxu0 0.0
  %1359 = vmatprep.subr.mxu0 0.0
  %1360 = vmatpush1.msra.mxu0 0.0
  %1361 = vmatprep.subr.mxu0 0.0
  %1362 = vmatpush1.msra.mxu0 0.0
  %1363 = vmatprep.subr.mxu0 0.0
  %1364 = vmatpush1.msra.mxu0 0.0
  %1365 = vmatprep.subr.mxu0 0.0
  %1366 = vmatpush1.msra.mxu0 0.0
  %1367 = vmatprep.subr.mxu0 0.0
  %1368 = vmatpush1.msra.mxu0 0.0
  %1369 = vmatprep.subr.mxu0 0.0
  %1370 = vmatpush1.msra.mxu0 0.0
  %1371 = vmatprep.subr.mxu0 0.0
  %1372 = vmatpush1.msra.mxu0 0.0
  %1373 = vmatprep.subr.mxu0 0.0
  %1374 = vmatpush1.msra.mxu0 0.0
  %1375 = vmatprep.subr.mxu0 0.0
  %1376 = vmatpush1.msra.mxu0 0.0
  %1377 = vmatprep.subr.mxu0 0.0
  %1378 = vmatpush1.msra.mxu0 0.0
  %1379 = vmatprep.subr.mxu0 0.0
  %1380 = vmatpush1.msra.mxu0 0.0
  %1381 = vmatprep.subr.mxu0 0.0
  %1382 = vmatpush1.msra.mxu0 0.0
  %1383 = vmatprep.subr.mxu0 0.0
  %1384 = vmatpush1.msra.mxu0 0.0
  %1385 = vmatprep.subr.mxu0 0.0
  %1386 = vmatpush1.msra.mxu0 0.0
  %1387 = vmatprep.subr.mxu0 0.0
  %1388 = vmatpush1.msra.mxu0 0.0
  %1389 = vmatprep.subr.mxu0 0.0
  %1390 = vmatpush1.msra.mxu0 0.0
  %1391 = vmatprep.subr.mxu0 0.0
  %1392 = vmatpush1.msra.mxu0 0.0
  %1393 = vmatprep.subr.mxu0 0.0
  %1394 = vmatpush1.msra.mxu0 0.0
  %1395 = vmatprep.subr.mxu0 0.0
  %1396 = vmatpush1.msra.mxu0 0.0
  %1397 = vmatprep.subr.mxu0 0.0
  %1398 = vmatpush1.msra.mxu0 0.0
  %1399 = vmatprep.subr.mxu0 0.0
  %1400 = vmatpush1.msra.mxu0 0.0
  %1401 = vmatprep.subr.mxu0 0.0
  %1402 = vmatpush1.msra.mxu0 0.0
  %1403 = vmatprep.subr.mxu0 0.0
  %1404 = vmatpush1.msra.mxu0 0.0
  %1405 = vmatprep.subr.mxu0 0.0
  %1406 = vmatpush1.msra.mxu0 0.0
  %1407 = vmatprep.subr.mxu0 0.0
  %1408 = vmatpush1.msra.mxu0 0.0
  %1409 = vmatprep.subr.mxu0 0.0
  %1410 = vmatpush1.msra.mxu0 0.0
  %1411 = vmatprep.subr.mxu0 0.0
  %1412 = vmatpush1.msra.mxu0 0.0
  %1413 = vmatprep.mubr.f32.mxu0 0.0
  %1414 = vmatmul.mubr.f32.gmra.mrb[0].mxu0 %v1037
  %v1415 = vpop.f32.mrb[0].mxu0
  %v1416 = vadd.f32 %v523, %v1415
  %v1417 = vpop.f32.mrb[0].mxu0
  %1418 = vdwg.mxu0
  %1419 = vmatprep.subr.mxu0 0.0
  %1420 = vmatpush1.msra.mxu0 %v49
  %1421 = vmatprep.subr.mxu0 0.0
  %1422 = vmatpush1.msra.mxu0 %v50
  %1423 = vmatprep.subr.mxu0 0.0
  %1424 = vmatpush1.msra.mxu0 0.0
  %1425 = vmatprep.subr.mxu0 0.0
  %1426 = vmatpush1.msra.mxu0 0.0
  %1427 = vmatprep.subr.mxu0 0.0
  %1428 = vmatpush1.msra.mxu0 0.0
  %1429 = vmatprep.subr.mxu0 0.0
  %1430 = vmatpush1.msra.mxu0 0.0
  %1431 = vmatprep.subr.mxu0 0.0
  %1432 = vmatpush1.msra.mxu0 0.0
  %1433 = vmatprep.subr.mxu0 0.0
  %1434 = vmatpush1.msra.mxu0 0.0
  %1435 = vmatprep.subr.mxu0 0.0
  %1436 = vmatpush1.msra.mxu0 0.0
  %1437 = vmatprep.subr.mxu0 0.0
  %1438 = vmatpush1.msra.mxu0 0.0
  %1439 = vmatprep.subr.mxu0 0.0
  %1440 = vmatpush1.msra.mxu0 0.0
  %1441 = vmatprep.subr.mxu0 0.0
  %1442 = vmatpush1.msra.mxu0 0.0
  %1443 = vmatprep.subr.mxu0 0.0
  %1444 = vmatpush1.msra.mxu0 0.0
  %1445 = vmatprep.subr.mxu0 0.0
  %1446 = vmatpush1.msra.mxu0 0.0
  %1447 = vmatprep.subr.mxu0 0.0
  %1448 = vmatpush1.msra.mxu0 0.0
  %1449 = vmatprep.subr.mxu0 0.0
  %1450 = vmatpush1.msra.mxu0 0.0
  %1451 = vmatprep.subr.mxu0 0.0
  %1452 = vmatpush1.msra.mxu0 0.0
  %1453 = vmatprep.subr.mxu0 0.0
  %1454 = vmatpush1.msra.mxu0 0.0
  %1455 = vmatprep.subr.mxu0 0.0
  %1456 = vmatpush1.msra.mxu0 0.0
  %1457 = vmatprep.subr.mxu0 0.0
  %1458 = vmatpush1.msra.mxu0 0.0
  %1459 = vmatprep.subr.mxu0 0.0
  %1460 = vmatpush1.msra.mxu0 0.0
  %1461 = vmatprep.subr.mxu0 0.0
  %1462 = vmatpush1.msra.mxu0 0.0
  %1463 = vmatprep.subr.mxu0 0.0
  %1464 = vmatpush1.msra.mxu0 0.0
  %1465 = vmatprep.subr.mxu0 0.0
  %1466 = vmatpush1.msra.mxu0 0.0
  %1467 = vmatprep.subr.mxu0 0.0
  %1468 = vmatpush1.msra.mxu0 0.0
  %1469 = vmatprep.subr.mxu0 0.0
  %1470 = vmatpush1.msra.mxu0 0.0
  %1471 = vmatprep.subr.mxu0 0.0
  %1472 = vmatpush1.msra.mxu0 0.0
  %1473 = vmatprep.subr.mxu0 0.0
  %1474 = vmatpush1.msra.mxu0 0.0
  %1475 = vmatprep.subr.mxu0 0.0
  %1476 = vmatpush1.msra.mxu0 0.0
  %1477 = vmatprep.subr.mxu0 0.0
  %1478 = vmatpush1.msra.mxu0 0.0
  %1479 = vmatprep.subr.mxu0 0.0
  %1480 = vmatpush1.msra.mxu0 0.0
  %1481 = vmatprep.subr.mxu0 0.0
  %1482 = vmatpush1.msra.mxu0 0.0
  %1483 = vmatprep.mubr.f32.mxu0 0.0
  %1484 = vmatmul.mubr.f32.gmra.mrb[0].mxu0 %v1110
  %v1485 = vpop.f32.mrb[0].mxu0
  %v1486 = vadd.f32 %v593, %v1485
  %v1487 = vpop.f32.mrb[0].mxu0
  %1488 = vdwg.mxu0
  %1489 = vmatprep.subr.mxu0 0.0
  %1490 = vmatpush1.msra.mxu0 %v51
  %1491 = vmatprep.subr.mxu0 0.0
  %1492 = vmatpush1.msra.mxu0 %v52
  %1493 = vmatprep.subr.mxu0 0.0
  %1494 = vmatpush1.msra.mxu0 0.0
  %1495 = vmatprep.subr.mxu0 0.0
  %1496 = vmatpush1.msra.mxu0 0.0
  %1497 = vmatprep.subr.mxu0 0.0
  %1498 = vmatpush1.msra.mxu0 0.0
  %1499 = vmatprep.subr.mxu0 0.0
  %1500 = vmatpush1.msra.mxu0 0.0
  %1501 = vmatprep.subr.mxu0 0.0
  %1502 = vmatpush1.msra.mxu0 0.0
  %1503 = vmatprep.subr.mxu0 0.0
  %1504 = vmatpush1.msra.mxu0 0.0
  %1505 = vmatprep.subr.mxu0 0.0
  %1506 = vmatpush1.msra.mxu0 0.0
  %1507 = vmatprep.subr.mxu0 0.0
  %1508 = vmatpush1.msra.mxu0 0.0
  %1509 = vmatprep.subr.mxu0 0.0
  %1510 = vmatpush1.msra.mxu0 0.0
  %1511 = vmatprep.subr.mxu0 0.0
  %1512 = vmatpush1.msra.mxu0 0.0
  %1513 = vmatprep.subr.mxu0 0.0
  %1514 = vmatpush1.msra.mxu0 0.0
  %1515 = vmatprep.subr.mxu0 0.0
  %1516 = vmatpush1.msra.mxu0 0.0
  %1517 = vmatprep.subr.mxu0 0.0
  %1518 = vmatpush1.msra.mxu0 0.0
  %1519 = vmatprep.subr.mxu0 0.0
  %1520 = vmatpush1.msra.mxu0 0.0
  %1521 = vmatprep.subr.mxu0 0.0
  %1522 = vmatpush1.msra.mxu0 0.0
  %1523 = vmatprep.subr.mxu0 0.0
  %1524 = vmatpush1.msra.mxu0 0.0
  %1525 = vmatprep.subr.mxu0 0.0
  %1526 = vmatpush1.msra.mxu0 0.0
  %1527 = vmatprep.subr.mxu0 0.0
  %1528 = vmatpush1.msra.mxu0 0.0
  %1529 = vmatprep.subr.mxu0 0.0
  %1530 = vmatpush1.msra.mxu0 0.0
  %1531 = vmatprep.subr.mxu0 0.0
  %1532 = vmatpush1.msra.mxu0 0.0
  %1533 = vmatprep.subr.mxu0 0.0
  %1534 = vmatpush1.msra.mxu0 0.0
  %1535 = vmatprep.subr.mxu0 0.0
  %1536 = vmatpush1.msra.mxu0 0.0
  %1537 = vmatprep.subr.mxu0 0.0
  %1538 = vmatpush1.msra.mxu0 0.0
  %1539 = vmatprep.subr.mxu0 0.0
  %1540 = vmatpush1.msra.mxu0 0.0
  %1541 = vmatprep.subr.mxu0 0.0
  %1542 = vmatpush1.msra.mxu0 0.0
  %1543 = vmatprep.subr.mxu0 0.0
  %1544 = vmatpush1.msra.mxu0 0.0
  %1545 = vmatprep.subr.mxu0 0.0
  %1546 = vmatpush1.msra.mxu0 0.0
  %1547 = vmatprep.subr.mxu0 0.0
  %1548 = vmatpush1.msra.mxu0 0.0
  %1549 = vmatprep.subr.mxu0 0.0
  %1550 = vmatpush1.msra.mxu0 0.0
  %1551 = vmatprep.subr.mxu0 0.0
  %1552 = vmatpush1.msra.mxu0 0.0
  %1553 = vmatprep.mubr.f32.mxu0 0.0
  %1554 = vmatmul.mubr.f32.gmra.mrb[0].mxu0 %v1183
  %v1555 = vpop.f32.mrb[0].mxu0
  %v1556 = vadd.f32 %v663, %v1555
  %v1557 = vpop.f32.mrb[0].mxu0
  %1558 = vdwg.mxu0
  %v1559 = vxor.u32 %v1346, 2147483648
  %v1560 = vxor.u32 %v1416, 2147483648
  %v1561 = vxor.u32 %v1486, 2147483648
  %v1562 = vxor.u32 %v1556, 2147483648
  %v1563 = vmul.f32 %v1559, 1.442695
  %v1564 = vpow.pop %v1563
  %v1565 = vmul.f32 %v1560, 1.442695
  %v1566 = vpow.pop %v1565
  %v1567 = vmul.f32 %v1561, 1.442695
  %v1568 = vpow.pop %v1567
  %v1569 = vmul.f32 %v1562, 1.442695
  %v1570 = vpow.pop %v1569
  %v1571 = vadd.f32 %v1564, 1.0
  %v1572 = vadd.f32 %v1566, 1.0
  %v1573 = vadd.f32 %v1568, 1.0
  %v1574 = vadd.f32 %v1570, 1.0
  %v1575 = vrcp.pop %v1571
  %v1576 = vmul.f32 1.0, %v1575
  %v1577 = vrcp.pop %v1572
  %v1578 = vmul.f32 1.0, %v1577
  %v1579 = vrcp.pop %v1573
  %v1580 = vmul.f32 1.0, %v1579
  %v1581 = vrcp.pop %v1574
  %v1582 = vmul.f32 1.0, %v1581
  %v1583 = vmul.f32 %v1272, %v749
  %v1584 = vmul.f32 %v1274, %v819
  %v1585 = vmul.f32 %v1276, %v889
  %v1586 = vmul.f32 %v1278, %v959
  %1587 = vmatprep.subr.mxu0 0.0
  %1588 = vmatpush1.msra.mxu0 %v53
  %1589 = vmatprep.subr.mxu0 0.0
  %1590 = vmatpush1.msra.mxu0 %v54
  %1591 = vmatprep.subr.mxu0 0.0
  %1592 = vmatpush1.msra.mxu0 0.0
  %1593 = vmatprep.subr.mxu0 0.0
  %1594 = vmatpush1.msra.mxu0 0.0
  %1595 = vmatprep.subr.mxu0 0.0
  %1596 = vmatpush1.msra.mxu0 0.0
  %1597 = vmatprep.subr.mxu0 0.0
  %1598 = vmatpush1.msra.mxu0 0.0
  %1599 = vmatprep.subr.mxu0 0.0
  %1600 = vmatpush1.msra.mxu0 0.0
  %1601 = vmatprep.subr.mxu0 0.0
  %1602 = vmatpush1.msra.mxu0 0.0
  %1603 = vmatprep.subr.mxu0 0.0
  %1604 = vmatpush1.msra.mxu0 0.0
  %1605 = vmatprep.subr.mxu0 0.0
  %1606 = vmatpush1.msra.mxu0 0.0
  %1607 = vmatprep.subr.mxu0 0.0
  %1608 = vmatpush1.msra.mxu0 0.0
  %1609 = vmatprep.subr.mxu0 0.0
  %1610 = vmatpush1.msra.mxu0 0.0
  %1611 = vmatprep.subr.mxu0 0.0
  %1612 = vmatpush1.msra.mxu0 0.0
  %1613 = vmatprep.subr.mxu0 0.0
  %1614 = vmatpush1.msra.mxu0 0.0
  %1615 = vmatprep.subr.mxu0 0.0
  %1616 = vmatpush1.msra.mxu0 0.0
  %1617 = vmatprep.subr.mxu0 0.0
  %1618 = vmatpush1.msra.mxu0 0.0
  %1619 = vmatprep.subr.mxu0 0.0
  %1620 = vmatpush1.msra.mxu0 0.0
  %1621 = vmatprep.subr.mxu0 0.0
  %1622 = vmatpush1.msra.mxu0 0.0
  %1623 = vmatprep.subr.mxu0 0.0
  %1624 = vmatpush1.msra.mxu0 0.0
  %1625 = vmatprep.subr.mxu0 0.0
  %1626 = vmatpush1.msra.mxu0 0.0
  %1627 = vmatprep.subr.mxu0 0.0
  %1628 = vmatpush1.msra.mxu0 0.0
  %1629 = vmatprep.subr.mxu0 0.0
  %1630 = vmatpush1.msra.mxu0 0.0
  %1631 = vmatprep.subr.mxu0 0.0
  %1632 = vmatpush1.msra.mxu0 0.0
  %1633 = vmatprep.subr.mxu0 0.0
  %1634 = vmatpush1.msra.mxu0 0.0
  %1635 = vmatprep.subr.mxu0 0.0
  %1636 = vmatpush1.msra.mxu0 0.0
  %1637 = vmatprep.subr.mxu0 0.0
  %1638 = vmatpush1.msra.mxu0 0.0
  %1639 = vmatprep.subr.mxu0 0.0
  %1640 = vmatpush1.msra.mxu0 0.0
  %1641 = vmatprep.subr.mxu0 0.0
  %1642 = vmatpush1.msra.mxu0 0.0
  %1643 = vmatprep.subr.mxu0 0.0
  %1644 = vmatpush1.msra.mxu0 0.0
  %1645 = vmatprep.subr.mxu0 0.0
  %1646 = vmatpush1.msra.mxu0 0.0
  %1647 = vmatprep.subr.mxu0 0.0
  %1648 = vmatpush1.msra.mxu0 0.0
  %1649 = vmatprep.subr.mxu0 0.0
  %1650 = vmatpush1.msra.mxu0 0.0
  %1651 = vmatprep.mubr.f32.mxu0 0.0
  %1652 = vmatmul.mubr.f32.gmra.mrb[0].mxu0 %v964
  %v1653 = vpop.f32.mrb[0].mxu0
  %v1654 = vadd.f32 %v1583, %v1653
  %v1655 = vpop.f32.mrb[0].mxu0
  %1656 = vdwg.mxu0
  %1657 = vmatprep.subr.mxu0 0.0
  %1658 = vmatpush1.msra.mxu0 %v55
  %1659 = vmatprep.subr.mxu0 0.0
  %1660 = vmatpush1.msra.mxu0 %v56
  %1661 = vmatprep.subr.mxu0 0.0
  %1662 = vmatpush1.msra.mxu0 0.0
  %1663 = vmatprep.subr.mxu0 0.0
  %1664 = vmatpush1.msra.mxu0 0.0
  %1665 = vmatprep.subr.mxu0 0.0
  %1666 = vmatpush1.msra.mxu0 0.0
  %1667 = vmatprep.subr.mxu0 0.0
  %1668 = vmatpush1.msra.mxu0 0.0
  %1669 = vmatprep.subr.mxu0 0.0
  %1670 = vmatpush1.msra.mxu0 0.0
  %1671 = vmatprep.subr.mxu0 0.0
  %1672 = vmatpush1.msra.mxu0 0.0
  %1673 = vmatprep.subr.mxu0 0.0
  %1674 = vmatpush1.msra.mxu0 0.0
  %1675 = vmatprep.subr.mxu0 0.0
  %1676 = vmatpush1.msra.mxu0 0.0
  %1677 = vmatprep.subr.mxu0 0.0
  %1678 = vmatpush1.msra.mxu0 0.0
  %1679 = vmatprep.subr.mxu0 0.0
  %1680 = vmatpush1.msra.mxu0 0.0
  %1681 = vmatprep.subr.mxu0 0.0
  %1682 = vmatpush1.msra.mxu0 0.0
  %1683 = vmatprep.subr.mxu0 0.0
  %1684 = vmatpush1.msra.mxu0 0.0
  %1685 = vmatprep.subr.mxu0 0.0
  %1686 = vmatpush1.msra.mxu0 0.0
  %1687 = vmatprep.subr.mxu0 0.0
  %1688 = vmatpush1.msra.mxu0 0.0
  %1689 = vmatprep.subr.mxu0 0.0
  %1690 = vmatpush1.msra.mxu0 0.0
  %1691 = vmatprep.subr.mxu0 0.0
  %1692 = vmatpush1.msra.mxu0 0.0
  %1693 = vmatprep.subr.mxu0 0.0
  %1694 = vmatpush1.msra.mxu0 0.0
  %1695 = vmatprep.subr.mxu0 0.0
  %1696 = vmatpush1.msra.mxu0 0.0
  %1697 = vmatprep.subr.mxu0 0.0
  %1698 = vmatpush1.msra.mxu0 0.0
  %1699 = vmatprep.subr.mxu0 0.0
  %1700 = vmatpush1.msra.mxu0 0.0
  %1701 = vmatprep.subr.mxu0 0.0
  %1702 = vmatpush1.msra.mxu0 0.0
  %1703 = vmatprep.subr.mxu0 0.0
  %1704 = vmatpush1.msra.mxu0 0.0
  %1705 = vmatprep.subr.mxu0 0.0
  %1706 = vmatpush1.msra.mxu0 0.0
  %1707 = vmatprep.subr.mxu0 0.0
  %1708 = vmatpush1.msra.mxu0 0.0
  %1709 = vmatprep.subr.mxu0 0.0
  %1710 = vmatpush1.msra.mxu0 0.0
  %1711 = vmatprep.subr.mxu0 0.0
  %1712 = vmatpush1.msra.mxu0 0.0
  %1713 = vmatprep.subr.mxu0 0.0
  %1714 = vmatpush1.msra.mxu0 0.0
  %1715 = vmatprep.subr.mxu0 0.0
  %1716 = vmatpush1.msra.mxu0 0.0
  %1717 = vmatprep.subr.mxu0 0.0
  %1718 = vmatpush1.msra.mxu0 0.0
  %1719 = vmatprep.subr.mxu0 0.0
  %1720 = vmatpush1.msra.mxu0 0.0
  %1721 = vmatprep.mubr.f32.mxu0 0.0
  %1722 = vmatmul.mubr.f32.gmra.mrb[0].mxu0 %v1037
  %v1723 = vpop.f32.mrb[0].mxu0
  %v1724 = vadd.f32 %v1584, %v1723
  %v1725 = vpop.f32.mrb[0].mxu0
  %1726 = vdwg.mxu0
  %1727 = vmatprep.subr.mxu0 0.0
  %1728 = vmatpush1.msra.mxu0 %v57
  %1729 = vmatprep.subr.mxu0 0.0
  %1730 = vmatpush1.msra.mxu0 %v58
  %1731 = vmatprep.subr.mxu0 0.0
  %1732 = vmatpush1.msra.mxu0 0.0
  %1733 = vmatprep.subr.mxu0 0.0
  %1734 = vmatpush1.msra.mxu0 0.0
  %1735 = vmatprep.subr.mxu0 0.0
  %1736 = vmatpush1.msra.mxu0 0.0
  %1737 = vmatprep.subr.mxu0 0.0
  %1738 = vmatpush1.msra.mxu0 0.0
  %1739 = vmatprep.subr.mxu0 0.0
  %1740 = vmatpush1.msra.mxu0 0.0
  %1741 = vmatprep.subr.mxu0 0.0
  %1742 = vmatpush1.msra.mxu0 0.0
  %1743 = vmatprep.subr.mxu0 0.0
  %1744 = vmatpush1.msra.mxu0 0.0
  %1745 = vmatprep.subr.mxu0 0.0
  %1746 = vmatpush1.msra.mxu0 0.0
  %1747 = vmatprep.subr.mxu0 0.0
  %1748 = vmatpush1.msra.mxu0 0.0
  %1749 = vmatprep.subr.mxu0 0.0
  %1750 = vmatpush1.msra.mxu0 0.0
  %1751 = vmatprep.subr.mxu0 0.0
  %1752 = vmatpush1.msra.mxu0 0.0
  %1753 = vmatprep.subr.mxu0 0.0
  %1754 = vmatpush1.msra.mxu0 0.0
  %1755 = vmatprep.subr.mxu0 0.0
  %1756 = vmatpush1.msra.mxu0 0.0
  %1757 = vmatprep.subr.mxu0 0.0
  %1758 = vmatpush1.msra.mxu0 0.0
  %1759 = vmatprep.subr.mxu0 0.0
  %1760 = vmatpush1.msra.mxu0 0.0
  %1761 = vmatprep.subr.mxu0 0.0
  %1762 = vmatpush1.msra.mxu0 0.0
  %1763 = vmatprep.subr.mxu0 0.0
  %1764 = vmatpush1.msra.mxu0 0.0
  %1765 = vmatprep.subr.mxu0 0.0
  %1766 = vmatpush1.msra.mxu0 0.0
  %1767 = vmatprep.subr.mxu0 0.0
  %1768 = vmatpush1.msra.mxu0 0.0
  %1769 = vmatprep.subr.mxu0 0.0
  %1770 = vmatpush1.msra.mxu0 0.0
  %1771 = vmatprep.subr.mxu0 0.0
  %1772 = vmatpush1.msra.mxu0 0.0
  %1773 = vmatprep.subr.mxu0 0.0
  %1774 = vmatpush1.msra.mxu0 0.0
  %1775 = vmatprep.subr.mxu0 0.0
  %1776 = vmatpush1.msra.mxu0 0.0
  %1777 = vmatprep.subr.mxu0 0.0
  %1778 = vmatpush1.msra.mxu0 0.0
  %1779 = vmatprep.subr.mxu0 0.0
  %1780 = vmatpush1.msra.mxu0 0.0
  %1781 = vmatprep.subr.mxu0 0.0
  %1782 = vmatpush1.msra.mxu0 0.0
  %1783 = vmatprep.subr.mxu0 0.0
  %1784 = vmatpush1.msra.mxu0 0.0
  %1785 = vmatprep.subr.mxu0 0.0
  %1786 = vmatpush1.msra.mxu0 0.0
  %1787 = vmatprep.subr.mxu0 0.0
  %1788 = vmatpush1.msra.mxu0 0.0
  %1789 = vmatprep.subr.mxu0 0.0
  %1790 = vmatpush1.msra.mxu0 0.0
  %1791 = vmatprep.mubr.f32.mxu0 0.0
  %1792 = vmatmul.mubr.f32.gmra.mrb[0].mxu0 %v1110
  %v1793 = vpop.f32.mrb[0].mxu0
  %v1794 = vadd.f32 %v1585, %v1793
  %v1795 = vpop.f32.mrb[0].mxu0
  %1796 = vdwg.mxu0
  %1797 = vmatprep.subr.mxu0 0.0
  %1798 = vmatpush1.msra.mxu0 %v59
  %1799 = vmatprep.subr.mxu0 0.0
  %1800 = vmatpush1.msra.mxu0 %v60
  %1801 = vmatprep.subr.mxu0 0.0
  %1802 = vmatpush1.msra.mxu0 0.0
  %1803 = vmatprep.subr.mxu0 0.0
  %1804 = vmatpush1.msra.mxu0 0.0
  %1805 = vmatprep.subr.mxu0 0.0
  %1806 = vmatpush1.msra.mxu0 0.0
  %1807 = vmatprep.subr.mxu0 0.0
  %1808 = vmatpush1.msra.mxu0 0.0
  %1809 = vmatprep.subr.mxu0 0.0
  %1810 = vmatpush1.msra.mxu0 0.0
  %1811 = vmatprep.subr.mxu0 0.0
  %1812 = vmatpush1.msra.mxu0 0.0
  %1813 = vmatprep.subr.mxu0 0.0
  %1814 = vmatpush1.msra.mxu0 0.0
  %1815 = vmatprep.subr.mxu0 0.0
  %1816 = vmatpush1.msra.mxu0 0.0
  %1817 = vmatprep.subr.mxu0 0.0
  %1818 = vmatpush1.msra.mxu0 0.0
  %1819 = vmatprep.subr.mxu0 0.0
  %1820 = vmatpush1.msra.mxu0 0.0
  %1821 = vmatprep.subr.mxu0 0.0
  %1822 = vmatpush1.msra.mxu0 0.0
  %1823 = vmatprep.subr.mxu0 0.0
  %1824 = vmatpush1.msra.mxu0 0.0
  %1825 = vmatprep.subr.mxu0 0.0
  %1826 = vmatpush1.msra.mxu0 0.0
  %1827 = vmatprep.subr.mxu0 0.0
  %1828 = vmatpush1.msra.mxu0 0.0
  %1829 = vmatprep.subr.mxu0 0.0
  %1830 = vmatpush1.msra.mxu0 0.0
  %1831 = vmatprep.subr.mxu0 0.0
  %1832 = vmatpush1.msra.mxu0 0.0
  %1833 = vmatprep.subr.mxu0 0.0
  %1834 = vmatpush1.msra.mxu0 0.0
  %1835 = vmatprep.subr.mxu0 0.0
  %1836 = vmatpush1.msra.mxu0 0.0
  %1837 = vmatprep.subr.mxu0 0.0
  %1838 = vmatpush1.msra.mxu0 0.0
  %1839 = vmatprep.subr.mxu0 0.0
  %1840 = vmatpush1.msra.mxu0 0.0
  %1841 = vmatprep.subr.mxu0 0.0
  %1842 = vmatpush1.msra.mxu0 0.0
  %1843 = vmatprep.subr.mxu0 0.0
  %1844 = vmatpush1.msra.mxu0 0.0
  %1845 = vmatprep.subr.mxu0 0.0
  %1846 = vmatpush1.msra.mxu0 0.0
  %1847 = vmatprep.subr.mxu0 0.0
  %1848 = vmatpush1.msra.mxu0 0.0
  %1849 = vmatprep.subr.mxu0 0.0
  %1850 = vmatpush1.msra.mxu0 0.0
  %1851 = vmatprep.subr.mxu0 0.0
  %1852 = vmatpush1.msra.mxu0 0.0
  %1853 = vmatprep.subr.mxu0 0.0
  %1854 = vmatpush1.msra.mxu0 0.0
  %1855 = vmatprep.subr.mxu0 0.0
  %1856 = vmatpush1.msra.mxu0 0.0
  %1857 = vmatprep.subr.mxu0 0.0
  %1858 = vmatpush1.msra.mxu0 0.0
  %1859 = vmatprep.subr.mxu0 0.0
  %1860 = vmatpush1.msra.mxu0 0.0
  %1861 = vmatprep.mubr.f32.mxu0 0.0
  %1862 = vmatmul.mubr.f32.gmra.mrb[0].mxu0 %v1183
  %v1863 = vpop.f32.mrb[0].mxu0
  %v1864 = vadd.f32 %v1586, %v1863
  %v1865 = vpop.f32.mrb[0].mxu0
  %1866 = vdwg.mxu0
  %v1867 = vtanh.pop %v1654
  %v1868 = vtanh.pop %v1724
  %v1869 = vtanh.pop %v1794
  %v1870 = vtanh.pop %v1864
  %v1871 = vsub.f32 %v33, %v1867
  %v1872 = vsub.f32 %v34, %v1868
  %v1873 = vsub.f32 %v35, %v1869
  %v1874 = vsub.f32 %v36, %v1870
  %v1875 = vmul.f32 %v1576, %v1871
  %v1876 = vmul.f32 %v1578, %v1872
  %v1877 = vmul.f32 %v1580, %v1873
  %v1878 = vmul.f32 %v1582, %v1874
  %v1879 = vadd.f32 %v1867, %v1875
  %v1880 = vadd.f32 %v1868, %v1876
  %v1881 = vadd.f32 %v1869, %v1877
  %v1882 = vadd.f32 %v1870, %v1878
  %vm1883 = vcmask 254976
  %1884 = vst.msk [vmem:[%s8] sm:$0x3] %vm1883, %v1879
  %1885 = vst.msk [vmem:[%s8 + $0x2] sm:$0x3] %vm1883, %v1880
  %1886 = vst.msk [vmem:[%s8 + $0x4] sm:$0x3] %vm1883, %v1881
  %1887 = vst.msk [vmem:[%s8 + $0x6] sm:$0x3] %vm1883, %v1882
  // Predicated region
  $region34: #{group_gru_cell.1} parent=0 // pred_check
    _
  $region35: #{group_gru_cell.1} parent=0 // pred_check_branch
    %1889 = sbr.rel (0) target = $region37
  $region36: #{group_gru_cell.1} parent=0 // pred_region
    _
  $region37: #{group_gru_cell.1} parent=0 // pred_fallthru
    _
  // Predicated region
  $region38: #{group_gru_cell.1} parent=0 // pred_check
    _
  $region39: #{group_gru_cell.1} parent=0 // pred_check_branch
    %1891 = sbr.rel (0) target = $region41
  $region40: #{group_gru_cell.1} parent=0 // pred_region
    _
  $region41: #{group_gru_cell.1} parent=0 // pred_fallthru
    _

</llo_original>
